<compile_context>
chip_gen: v7x
topology: tpu7x:2x2x1
jax: 0.10.0
libtpu: 0.0.40
codegen_flags: <defaults>
</compile_context>

<pallas_src>
import math
from typing import List, Sequence, Union

import jax
import jax.numpy as jnp
from jax import lax
from jax.experimental import pallas as pl
from jax.experimental.pallas import tpu as pltpu

_MIB = 1024 * 1024


def _round_up(x: int, m: int) -> int:
    return ((x + m - 1) // m) * m


def _cdiv(a: int, b: int) -> int:
    return -(-a // b)


def _tpu_generation() -> str:
    try:
        kind = jax.devices()[0].device_kind.lower()
    except Exception:
        return "unknown"
    if "v5 lite" in kind or "v5e" in kind or "v5litepod" in kind:
        return "v5e"
    if "v6" in kind:
        return "v6e"
    if "v7" in kind or "7x" in kind:
        return "v7x"
    if "v4" in kind or "v5" in kind:      # v4 / v5p: 128 MiB VMEM class, megacore
        return "v6e"
    return "unknown"


# (tm, tn, tk) base tiles keyed by operand itemsize (2 = bf16/fp16, 4 = f32),
# plus the scoped-VMEM limit passed to Mosaic.  Tiles are big enough to be
# MXU-bound per generation while the double-buffered inputs + resident output
# (+ optional f32 scratch) stay comfortably inside VMEM.
_TILE_TABLE = {
    "v5e":     {2: (512, 512, 1024),   4: (512, 512, 512),   "vmem": 64 * _MIB},
    "v6e":     {2: (1024, 1024, 1024), 4: (1024, 1024, 512), "vmem": 80 * _MIB},
    "v7x":     {2: (1024, 1024, 512),  4: (512, 1024, 512),  "vmem": 48 * _MIB},
    "unknown": {2: (512, 1024, 512),   4: (512, 512, 512),   "vmem": 48 * _MIB},
}


def _fit_tile(dim: int, base: int, mult: int) -> int:
    """Balanced tile: the full dim if it fits one tile (full-extent blocks are
    always layout-legal), otherwise pick the tile COUNT first and round the
    tile to `mult` so boundary padding stays small and blocks stay aligned."""
    if dim <= base:
        return dim
    nt = _cdiv(dim, base)
    return _round_up(_cdiv(dim, nt), mult)


def _make_matmul_kernel(b_is_nt: bool, multi_k: bool, use_scratch: bool):
    def contract(a, b):
        if b_is_nt:  # a: (tm, tk), b: (tn, tk) -> NT matmul, native on the MXU
            return lax.dot_general(a, b, (((1,), (1,)), ((), ())),
                                   preferred_element_type=jnp.float32)
        return jnp.dot(a, b, preferred_element_type=jnp.float32)

    if not multi_k:
        # Single K step: no accumulator, no predicates.
        def kernel(a_ref, b_ref, o_ref):
            o_ref[...] = contract(a_ref[...], b_ref[...]).astype(o_ref.dtype)
        return kernel

    if not use_scratch:
        # f32 output: accumulate directly into the resident output block.
        def kernel(a_ref, b_ref, o_ref):
            @pl.when(pl.program_id(2) == 0)
            def _init():
                o_ref[...] = jnp.zeros_like(o_ref)

            o_ref[...] += contract(a_ref[...], b_ref[...])
        return kernel

    # Narrow output dtype: accumulate in an f32 VMEM scratch.
    def kernel(a_ref, b_ref, o_ref, acc_ref):
        @pl.when(pl.program_id(2) == 0)
        def _init():
            acc_ref[...] = jnp.zeros_like(acc_ref)

        acc_ref[...] += contract(a_ref[...], b_ref[...])

        @pl.when(pl.program_id(2) == pl.num_programs(2) - 1)
        def _finalize():
            o_ref[...] = acc_ref[...].astype(o_ref.dtype)

    return kernel


def _pallas_matmul(a2d: jax.Array, b2d: jax.Array, out_dtype, b_is_nt: bool) -> jax.Array:
    M, K = a2d.shape
    if b_is_nt:
        N, Kb = b2d.shape
    else:
        Kb, N = b2d.shape
    assert K == Kb, (K, Kb)

    cfg = _TILE_TABLE[_tpu_generation()]
    itemsize = jnp.dtype(a2d.dtype).itemsize
    tm_base, tn_base, tk_base = cfg[2 if itemsize <= 2 else 4]
    sub = 16 if itemsize <= 2 else 8      # sublane multiple for partial blocks

    tm = _fit_tile(M, tm_base, sub)
    tn = _fit_tile(N, tn_base, 128)
    tk = _fit_tile(K, tk_base, 128)

    # Megacore (v7x: 2 TCs): make sure the "parallel" axes expose >= 2 output
    # tiles when the problem is big enough to care.  Costs ~nothing on 1-TC chips.
    if _cdiv(M, tm) * _cdiv(N, tn) == 1 and M * N >= 256 * 1024:
        if M >= N and M >= 2 * sub:
            tm = _round_up(_cdiv(M, 2), sub)
        elif N >= 256:
            tn = _round_up(_cdiv(N, 2), 128)

    # Zero-pad K only (so garbage never contributes to kept outputs).  Ragged
    # M / N edges are handled by Pallas boundary-block masking — no HBM copies.
    Kp = _round_up(K, tk)
    if Kp != K:
        a2d = jnp.pad(a2d, ((0, 0), (0, Kp - K)))
        b2d = jnp.pad(b2d, ((0, 0), (0, Kp - K)) if b_is_nt
                      else ((0, Kp - K), (0, 0)))

    grid = (_cdiv(M, tm), _cdiv(N, tn), Kp // tk)
    multi_k = grid[2] > 1
    use_scratch = multi_k and jnp.dtype(out_dtype) != jnp.float32

    a_spec = pl.BlockSpec((tm, tk), lambda i, j, k: (i, k))
    b_spec = (pl.BlockSpec((tn, tk), lambda i, j, k: (j, k)) if b_is_nt
              else pl.BlockSpec((tk, tn), lambda i, j, k: (k, j)))
    o_spec = pl.BlockSpec((tm, tn), lambda i, j, k: (i, j))
    scratch = [pltpu.VMEM((tm, tn), jnp.float32)] if use_scratch else []

    gm, gn, _ = grid
    a_bytes = jnp.dtype(a2d.dtype).itemsize
    b_bytes = jnp.dtype(b2d.dtype).itemsize
    o_bytes = jnp.dtype(out_dtype).itemsize
    cost = pl.CostEstimate(
        flops=2 * (gm * tm) * (gn * tn) * Kp,
        transcendentals=0,
        # A is re-read once per N tile and B once per M tile under this grid.
        bytes_accessed=(gn * M * Kp * a_bytes + gm * Kp * N * b_bytes
                        + M * N * o_bytes),
    )

    kernel = _make_matmul_kernel(b_is_nt, multi_k, use_scratch)

    return pl.pallas_call(
        kernel,
        out_shape=jax.ShapeDtypeStruct((M, N), out_dtype),
        grid_spec=pltpu.PrefetchScalarGridSpec(
            num_scalar_prefetch=0,
            grid=grid,
            in_specs=[a_spec, b_spec],
            out_specs=o_spec,
            scratch_shapes=scratch,
        ),
        compiler_params=pltpu.CompilerParams(
            dimension_semantics=("parallel", "parallel", "arbitrary"),
            vmem_limit_bytes=cfg["vmem"],
        ),
        cost_estimate=cost,
    )(a2d, b2d)


class TensorDot:
    """JAX/Pallas equivalent of the PyTorch TensorDot op (torch.tensordot).

    Optional `compute_dtype` forces the MXU operand dtype (e.g. jnp.bfloat16
    for f32 inputs when the caller tolerates bf16 multiplies with f32
    accumulation — up to ~4x faster).  Default preserves torch semantics:
    bf16 inputs multiply in bf16, everything else in f32 (f32 accumulation
    always; results match full-f32 tensordot to ~1e-3 relative).
    """

    _TINY_MACS = 2 * 1024 * 1024     # below this, XLA wins (grid/pipe overhead)
    _MAX_HW_WASTE = 4.0              # (8,128)-granularity padding waste ratio

    def __init__(self, dims: Union[int, Sequence[Sequence[int]]],
                 compute_dtype=None) -> None:
        self.dims = dims
        self.compute_dtype = compute_dtype

    def __call__(self, tensor1: jax.Array, tensor2: jax.Array) -> jax.Array:
        if isinstance(self.dims, int):
            # torch semantics: contract last `dims` axes of t1 with first `dims` of t2.
            axes_a: List[int] = list(range(tensor1.ndim - self.dims, tensor1.ndim))
            axes_b: List[int] = list(range(self.dims))
        else:
            axes_a = [int(a) % tensor1.ndim for a in self.dims[0]]
            axes_b = [int(b) % tensor2.ndim for b in self.dims[1]]

        free_a = [i for i in range(tensor1.ndim) if i not in axes_a]
        free_b = [i for i in range(tensor2.ndim) if i not in axes_b]

        free_a_shape = [tensor1.shape[i] for i in free_a]
        free_b_shape = [tensor2.shape[i] for i in free_b]
        k_shape = [tensor1.shape[i] for i in axes_a]
        assert k_shape == [tensor2.shape[i] for i in axes_b], "contracted dims mismatch"

        M = math.prod(free_a_shape)
        K = math.prod(k_shape)
        N = math.prod(free_b_shape)
        out_dtype = jnp.result_type(tensor1.dtype, tensor2.dtype)
        out_shape = free_a_shape + free_b_shape

        # ---- fallback heuristics: XLA handles these better than the kernel.
        floating = jnp.issubdtype(out_dtype, jnp.floating)
        is_f64 = jnp.dtype(out_dtype) == jnp.float64
        macs = M * N * K
        hw_work = (_round_up(max(M, 1), 8) * _round_up(max(N, 1), 128)
                   * _round_up(max(K, 1), 128))
        skinny = hw_work > self._MAX_HW_WASTE * max(macs, 1)
        # TODO(synk): add an int8xint8->int32 Pallas path for v5e/v6e (v7x MXU has no int mode).
        if (not floating) or is_f64 or macs <= self._TINY_MACS or skinny:
            return jnp.tensordot(tensor1, tensor2,
                                 axes=(tuple(axes_a), tuple(axes_b))).astype(out_dtype)

        # ---- operand layouts; avoid wrapper-side HBM transposes when possible.
        perm_a = free_a + axes_a
        a_nd = tensor1 if perm_a == list(range(tensor1.ndim)) else jnp.transpose(tensor1, perm_a)
        # TODO(synk): a TN kernel variant could also fold away the A transpose above.
        a2d = a_nd.reshape(M, K)

        perm_b_nn = axes_b + free_b
        perm_b_nt = free_b + axes_b
        if perm_b_nn == list(range(tensor2.ndim)):
            b2d, b_is_nt = tensor2.reshape(K, N), False
        elif perm_b_nt == list(range(tensor2.ndim)):
            b2d, b_is_nt = tensor2.reshape(N, K), True     # in-kernel NT matmul
        else:
            b2d, b_is_nt = jnp.transpose(tensor2, perm_b_nn).reshape(K, N), False

        if self.compute_dtype is not None:
            compute_dtype = jnp.dtype(self.compute_dtype)
        else:
            compute_dtype = jnp.bfloat16 if out_dtype == jnp.bfloat16 else jnp.float32
        a2d = a2d.astype(compute_dtype)
        b2d = b2d.astype(compute_dtype)

        out2d = _pallas_matmul(a2d, b2d, out_dtype, b_is_nt)
        return out2d.reshape(out_shape)


if __name__ == "__main__":
    key = jax.random.PRNGKey(0)
    k1, k2, k3, k4, k5, k6, k7, k8 = jax.random.split(key, 8)

    # 1) Tiny canonical case, dims=2 -> XLA fallback path (semantics check).
    t1 = jax.random.normal(k1, (2, 4, 16, 8), dtype=jnp.float32)
    t2 = jax.random.normal(k2, (16, 8, 32), dtype=jnp.float32)
    out1 = jax.block_until_ready(TensorDot(dims=2)(t1, t2))
    ref1 = jnp.tensordot(t1, t2, axes=2)
    assert out1.shape == ref1.shape, (out1.shape, ref1.shape)
    assert jnp.allclose(out1, ref1, atol=1e-4, rtol=1e-4), "test1 mismatch"

    # 2) f32, explicit axes -> Pallas NN path with multi-step K accumulation
    #    directly in the resident f32 output block.
    t3 = jax.random.normal(k3, (2, 256, 1024), dtype=jnp.float32)
    t4 = jax.random.normal(k4, (1024, 4, 128), dtype=jnp.float32)
    out2 = jax.block_until_ready(TensorDot(dims=[[2], [0]])(t3, t4))
    ref2 = jnp.tensordot(t3, t4, axes=([2], [0]), precision=lax.Precision.HIGHEST)
    assert out2.shape == ref2.shape, (out2.shape, ref2.shape)
    assert jnp.allclose(out2, ref2, atol=1e-2, rtol=1e-2), "test2 mismatch"

    # 3) bf16, contracted axis is tensor2's LAST axis -> in-kernel NT matmul
    #    (no wrapper transpose), single K step (no accumulator).
    t5 = jax.random.normal(k5, (4, 128, 256), dtype=jnp.float32).astype(jnp.bfloat16)
    t6 = jax.random.normal(k6, (160, 256), dtype=jnp.float32).astype(jnp.bfloat16)
    out3 = jax.block_until_ready(TensorDot(dims=[[2], [1]])(t5, t6))
    ref3 = jnp.tensordot(t5.astype(jnp.float32), t6.astype(jnp.float32),
                         axes=([2], [1]), precision=lax.Precision.HIGHEST)
    assert out3.shape == ref3.shape == (4, 128, 160), (out3.shape, ref3.shape)
    assert jnp.allclose(out3.astype(jnp.float32), ref3, atol=0.25, rtol=2e-2), "test3 mismatch"

    # 4) bf16, dims=1 -> multi-step K accumulation through the f32 VMEM scratch.
    t7 = jax.random.normal(k7, (384, 1536), dtype=jnp.float32).astype(jnp.bfloat16)
    t8 = jax.random.normal(k8, (1536, 256), dtype=jnp.float32).astype(jnp.bfloat16)
    out4 = jax.block_until_ready(TensorDot(dims=1)(t7, t8))
    ref4 = jnp.tensordot(t7.astype(jnp.float32), t8.astype(jnp.float32), axes=1,
                         precision=lax.Precision.HIGHEST)
    assert out4.shape == ref4.shape, (out4.shape, ref4.shape)
    assert jnp.allclose(out4.astype(jnp.float32), ref4, atol=0.5, rtol=2e-2), "test4 mismatch"

    print("KERNEL_OK")
</pallas_src>

<mosaic_0001>
module attributes {stable_mosaic.version = 11 : i64} {
  func.func @kernel(%arg0: i32, %arg1: i32, %arg2: i32, %arg3: memref<256x512xf32, #tpu.memory_space<vmem>>, %arg4: memref<512x512xf32, #tpu.memory_space<vmem>>, %arg5: memref<256x512xf32, #tpu.memory_space<vmem>>) attributes {dimension_semantics = [#tpu.dimension_semantics<parallel>, #tpu.dimension_semantics<parallel>, #tpu.dimension_semantics<arbitrary>], iteration_bounds = array<i64: 2, 1, 2>, scalar_prefetch = 0 : i64, scratch_operands = 0 : i64, tpu.core_type = #tpu.core_type<tc>, window_params = [{transform_indices = @transform_0, window_bounds = array<i64: 256, 512>}, {transform_indices = @transform_1, window_bounds = array<i64: 512, 512>}, {transform_indices = @transform_2, window_bounds = array<i64: 256, 512>}]} {
    %c0_i32 = arith.constant 0 : i32
    %0 = arith.cmpi eq, %arg2, %c0_i32 : i32
    %1 = arith.extui %0 : i1 to i32
    %c0_i32_0 = arith.constant 0 : i32
    %2 = arith.cmpi ne, %1, %c0_i32_0 : i32
    scf.if %2 {
      %cst_8 = arith.constant 0.000000e+00 : f32
      %9 = vector.broadcast %cst_8 : f32 to vector<256x512xf32>
      %c0_9 = arith.constant 0 : index
      %c0_10 = arith.constant 0 : index
      %10 = vector.load %arg5[%c0_9, %c0_10] : memref<256x512xf32, #tpu.memory_space<vmem>>, vector<256x512xf32>
      tpu.vector_store %arg5[%c0_9, %c0_10], %9 {strides = array<i32>} : memref<256x512xf32, #tpu.memory_space<vmem>>, vector<256x512xf32>,
    } else {
    }
    %c0 = arith.constant 0 : index
    %c0_1 = arith.constant 0 : index
    %3 = vector.load %arg5[%c0, %c0_1] : memref<256x512xf32, #tpu.memory_space<vmem>>, vector<256x512xf32>
    %c0_2 = arith.constant 0 : index
    %c0_3 = arith.constant 0 : index
    %4 = vector.load %arg3[%c0_2, %c0_3] : memref<256x512xf32, #tpu.memory_space<vmem>>, vector<256x512xf32>
    %c0_4 = arith.constant 0 : index
    %c0_5 = arith.constant 0 : index
    %5 = vector.load %arg4[%c0_4, %c0_5] : memref<512x512xf32, #tpu.memory_space<vmem>>, vector<512x512xf32>
    %cst = arith.constant dense<0.000000e+00> : vector<256x512xf32>
    %6 = tpu.matmul %4, %5, %cst {dimension_numbers = #tpu.dot_dimension_numbers<[1], [0], [0], [1], [0, 0, 1, 1], [], []>} : vector<256x512xf32>, vector<512x512xf32>, vector<256x512xf32> -> vector<256x512xf32>
    %7 = arith.addf %3, %6 : vector<256x512xf32>
    %c0_6 = arith.constant 0 : index
    %c0_7 = arith.constant 0 : index
    %8 = vector.load %arg5[%c0_6, %c0_7] : memref<256x512xf32, #tpu.memory_space<vmem>>, vector<256x512xf32>
    tpu.vector_store %arg5[%c0_6, %c0_7], %7 {strides = array<i32>} : memref<256x512xf32, #tpu.memory_space<vmem>>, vector<256x512xf32>,
    return
  }
  func.func @transform_0(%arg0: i32, %arg1: i32, %arg2: i32) -> (i32, i32) {
    %c0_i32 = arith.constant 0 : i32
    return %arg0, %arg2 : i32, i32
  }
  func.func @transform_1(%arg0: i32, %arg1: i32, %arg2: i32) -> (i32, i32) {
    %c0_i32 = arith.constant 0 : i32
    return %arg2, %arg1 : i32, i32
  }
  func.func @transform_2(%arg0: i32, %arg1: i32, %arg2: i32) -> (i32, i32) {
    %c0_i32 = arith.constant 0 : i32
    return %arg0, %arg1 : i32, i32
  }
}

</mosaic_0001>

<llo_original>
// kernel: tpu_custom_call.1
$region0: #{tpu_custom_call.1}
  #allocation0 [shape = 'u32[]', space=smem, size = 0x4, offset = 0x4, fixed_abs, tag = 'smem constant byte address 0x4 - core index']
  #allocation1 [shape = 'u32[144,128]{1,0:T(1,128)}', space=vmem, size = 0x12000, scoped, tag = 'internal scratch']
  %s0 = inlined_call_operand.hbm [shape: f32[512,1024], index: 0, kind: input, shape index: {}]
  %s1 = inlined_call_operand.hbm [shape: f32[1024,512], index: 1, kind: input, shape index: {}]
  %s2 = inlined_call_operand.hbm [shape: f32[512,512], index: 2, kind: output, shape index: {}]
  %s3 = sld [smem:[#allocation0]]
  $region53: #{tpu_custom_call.1} parent=0
    _
  %s5 = ssub.s32 1, %s3
  %s6 = scalar_select 0, %s5, %s3
  $region1: #{tpu_custom_call.1} parent=0
    #allocation2 [shape = 'u8[1048576]{0}', space=vmem, size = 0x100000, scoped, tag = 'input window, operand 0']
    #allocation3 [shape = 's32[2]{0}', space=sflag, size = 0x8, scoped, tag = 'scoped memory for tpu_custom_call.1']
    #allocation4 [shape = 's32[2]{0}', space=sflag, size = 0x8, scoped, tag = 'scoped memory for tpu_custom_call.1']
    #allocation5 [shape = 'u8[2097152]{0}', space=vmem, size = 0x200000, scoped, tag = 'input window, operand 1']
    #allocation6 [shape = 's32[2]{0}', space=sflag, size = 0x8, scoped, tag = 'scoped memory for tpu_custom_call.1']
    #allocation7 [shape = 'u8[1048576]{0}', space=vmem, size = 0x100000, scoped, tag = 'output window, operand 0']
    %7 = vsyncpa [#allocation3], 0
    %s8 = scalar_lea.sflag [#allocation3], 1
    %9 = vsyncpa %s8, 0
    %10 = vsyncpa [#allocation6], 0
    %s11 = scalar_lea.sflag [#allocation6], 1
    %12 = vsyncpa %s11, 0
    %13 = vsyncpa [#allocation4], 0
    %s14 = scalar_lea.sflag [#allocation4], 1
    %15 = vsyncpa %s14, 0
    loop: start=0, step=1, limit=6
    $region2: #{tpu_custom_call.1} parent=1 // loop_pre_header
      _
    $region3: #{tpu_custom_call.1} parent=1 // loop_header
      %s17 = sphi 0, %s21
      %p18 = scmp.ge.s32.totalorder %s17, 6
      %s24 = sphi 0, %s43
      %s25 = sphi 0, %s39
      %s26 = sphi 0, %s35
      %s27 = sphi 0, %s24
      %s28 = sphi 0, %s25
      %s29 = sphi 0, %s26
      %s30 = sphi 0, %s27
      %s31 = sphi 0, %s28
      %s32 = sphi 0, %s29
      %s48 = sphi 0, %s50
      %s51 = sphi 0, %s48
      %s52 = sphi 0, %s51
      %s68 = sphi 0, %s52
      %s76 = sphi 0, %s78
      %s79 = sphi 0, %s76
      %s80 = sphi 0, %s79
      %s96 = sphi 0, %s80
      %s104 = sphi 0, %s106
      %s107 = sphi 0, %s104
      %s108 = sphi 0, %s107
      %s124 = sphi 0, %s108
    $region4: #{tpu_custom_call.1} parent=1 // loop_header_branch
      %20 = sbr.rel (%p18) target = $region8
    $region5: #{tpu_custom_call.1} parent=1 // loop_body
      %s22 = ssub.s32 %s17, 1
      %s23 = ssub.s32 %s17, 2
      %s33 = sadd.s32 1, %s26
      %p34 = scmp.ge.s32.totalorder %s33, 2
      %s35 = scalar_select %p34, 0, %s33
      %s36 = sadd.s32 1, %s25
      %s37 = scalar_select %p34, %s36, %s25
      %p38 = scmp.ge.s32.totalorder %s37, 1
      %s39 = scalar_select %p38, 0, %s37
      %s40 = sadd.s32 1, %s24
      %s41 = scalar_select %p38, %s40, %s24
      %p42 = scmp.ge.s32.totalorder %s41, 2
      %s43 = scalar_select %p42, 0, %s41
      %s44 = ssub.s32 %s24, %s43
      %s45 = ssub.s32 %s26, %s35
      %s46 = sor.u32 %s44, %s45
      %p47 = scmp.eq.s32.totalorder %s46, 0
      %s49 = sadd.s32 %s48, 1
      %s50 = scalar_select %p47, %s48, %s49
      %p53 = pneg %p47
      %p54 = scmp.eq.s32.totalorder %s17, 3
      %p55 = por %p53, %p54
      %p56 = scmp.ne.s32.totalorder %s48, %s51
      %p57 = scmp.eq.s32.totalorder %s17, 0
      %p58 = por %p56, %p57
      %p59 = scmp.ne.s32.totalorder %s48, %s51
      %p60 = scmp.eq.s32.totalorder %s22, 3
      %p61 = por %p59, %p60
      %p62 = scmp.ne.s32.totalorder %s51, %s52
      %p63 = scmp.eq.s32.totalorder %s22, 0
      %p64 = por %p62, %p63
      %p65 = scmp.ne.s32.totalorder %s51, %s52
      %p66 = scmp.eq.s32.totalorder %s23, 3
      %p67 = por %p65, %p66
      %p69 = scmp.ne.s32.totalorder %s52, %s68
      %p70 = scmp.eq.s32.totalorder %s23, 0
      %p71 = por %p69, %p70
      %s72 = ssub.s32 %s26, %s35
      %s73 = ssub.s32 %s25, %s39
      %s74 = sor.u32 %s72, %s73
      %p75 = scmp.eq.s32.totalorder %s74, 0
      %s77 = sadd.s32 %s76, 1
      %s78 = scalar_select %p75, %s76, %s77
      %p81 = pneg %p75
      %p82 = scmp.eq.s32.totalorder %s17, 3
      %p83 = por %p81, %p82
      %p84 = scmp.ne.s32.totalorder %s76, %s79
      %p85 = scmp.eq.s32.totalorder %s17, 0
      %p86 = por %p84, %p85
      %p87 = scmp.ne.s32.totalorder %s76, %s79
      %p88 = scmp.eq.s32.totalorder %s22, 3
      %p89 = por %p87, %p88
      %p90 = scmp.ne.s32.totalorder %s79, %s80
      %p91 = scmp.eq.s32.totalorder %s22, 0
      %p92 = por %p90, %p91
      %p93 = scmp.ne.s32.totalorder %s79, %s80
      %p94 = scmp.eq.s32.totalorder %s23, 3
      %p95 = por %p93, %p94
      %p97 = scmp.ne.s32.totalorder %s80, %s96
      %p98 = scmp.eq.s32.totalorder %s23, 0
      %p99 = por %p97, %p98
      %s100 = ssub.s32 %s24, %s43
      %s101 = ssub.s32 %s25, %s39
      %s102 = sor.u32 %s100, %s101
      %p103 = scmp.eq.s32.totalorder %s102, 0
      %s105 = sadd.s32 %s104, 1
      %s106 = scalar_select %p103, %s104, %s105
      %p109 = pneg %p103
      %p110 = scmp.eq.s32.totalorder %s17, 3
      %p111 = por %p109, %p110
      %p112 = scmp.ne.s32.totalorder %s104, %s107
      %p113 = scmp.eq.s32.totalorder %s17, 0
      %p114 = por %p112, %p113
      %p115 = scmp.ne.s32.totalorder %s104, %s107
      %p116 = scmp.eq.s32.totalorder %s22, 3
      %p117 = por %p115, %p116
      %p118 = scmp.ne.s32.totalorder %s107, %s108
      %p119 = scmp.eq.s32.totalorder %s22, 0
      %p120 = por %p118, %p119
      %p121 = scmp.ne.s32.totalorder %s107, %s108
      %p122 = scmp.eq.s32.totalorder %s23, 3
      %p123 = por %p121, %p122
      %p125 = scmp.ne.s32.totalorder %s108, %s124
      %p126 = scmp.eq.s32.totalorder %s23, 0
      %p127 = por %p125, %p126
      %p128 = scmp.le.s32.totalorder 1, %s17
      %p129 = scmp.lt.s32.totalorder %s17, 5
      %p130 = pnand %p128, %p129
      %p131 = pneg %p130
      // Predicated region
      $region9: #{tpu_custom_call.1} parent=5 // pred_check
        _
      $region10: #{tpu_custom_call.1} parent=5 // pred_check_branch
        %133 = sbr.rel (%p130) target = $region12
      $region11: #{tpu_custom_call.1} parent=5 // pred_region
        %s134 = ssub.s32 %s17, 1
      $region12: #{tpu_custom_call.1} parent=5 // pred_fallthru
        _
      %p135 = scmp.lt.s32.totalorder %s17, 4
      // Predicated region
      $region13: #{tpu_custom_call.1} parent=5 // pred_check
        %p136 = pneg %p135
      $region14: #{tpu_custom_call.1} parent=5 // pred_check_branch
        %138 = sbr.rel (%p136) target = $region16
      $region15: #{tpu_custom_call.1} parent=5 // pred_region
        // Predicated region
        $region17: #{tpu_custom_call.1} parent=15 // pred_check
          %p139 = pneg %p58
        $region18: #{tpu_custom_call.1} parent=15 // pred_check_branch
          %141 = sbr.rel (%p139) target = $region20
        $region19: #{tpu_custom_call.1} parent=15 // pred_region
          %s142 = sand.u32 %s48, 1
          %s143 = scalar_lea.sflag [#allocation3], %s142
          %s144 = sand.u32 %s48, 1
          %s145 = smul.addr %s144, 1024
          %s146 = scalar_lea.vmem [#allocation2], %s145
          %s147 = smul.u32 32, %s24
          %s148 = smul.u32 4, %s26
          %s150 = ssub.s32 16384, 16384
          %151 = vsyncadd %s143, %s150
          %s152 = smul.addr %s147, 8
          %s153 = sadd.s32 %s148, %s152
          %s154 = smul.addr %s153, 128
          %s155 = scalar_lea.hbm %s0, %s154
          %s156 = sshll.u32 %s146, 4
          %s157 = int_to_ptr.vmem [resolvable:$true] %s156
          %162 = dma.hbm_to_vmem [thread:$0]  %s155, 16384, %s157, %s143, 1024, 512, 32
        $region20: #{tpu_custom_call.1} parent=15 // pred_fallthru
          _
        // Predicated region
        $region21: #{tpu_custom_call.1} parent=15 // pred_check
          %p163 = pneg %p86
        $region22: #{tpu_custom_call.1} parent=15 // pred_check_branch
          %165 = sbr.rel (%p163) target = $region24
        $region23: #{tpu_custom_call.1} parent=15 // pred_region
          %s166 = sand.u32 %s76, 1
          %s167 = scalar_lea.sflag [#allocation6], %s166
          %s168 = sand.u32 %s76, 1
          %s169 = smul.addr %s168, 2048
          %s170 = scalar_lea.vmem [#allocation5], %s169
          %s171 = smul.u32 64, %s26
          %s172 = smul.u32 4, %s25
          %s174 = ssub.s32 32768, 32768
          %175 = vsyncadd %s167, %s174
          %s176 = smul.addr %s171, 4
          %s177 = sadd.s32 %s172, %s176
          %s178 = smul.addr %s177, 128
          %s179 = scalar_lea.hbm %s1, %s178
          %s180 = sshll.u32 %s170, 4
          %s181 = int_to_ptr.vmem [resolvable:$true] %s180
          %186 = dma.hbm_to_vmem [thread:$0]  %s179, 32768, %s181, %s167, 512, 512, 32
        $region24: #{tpu_custom_call.1} parent=15 // pred_fallthru
          _
      $region16: #{tpu_custom_call.1} parent=5 // pred_fallthru
        _
      %p187 = scmp.le.s32.totalorder 1, %s17
      %p188 = scmp.lt.s32.totalorder %s17, 5
      %p189 = pnand %p187, %p188
      %p190 = pneg %p189
      // Predicated region
      $region25: #{tpu_custom_call.1} parent=5 // pred_check
        _
      $region26: #{tpu_custom_call.1} parent=5 // pred_check_branch
        %192 = sbr.rel (%p189) target = $region28
      $region27: #{tpu_custom_call.1} parent=5 // pred_region
        %s193 = ssub.s32 %s17, 1
        %s194 = sand.u32 %s51, 1
        %s195 = scalar_lea.sflag [#allocation3], %s194
        %s196 = sand.u32 %s51, 1
        %s197 = smul.addr %s196, 1024
        %s198 = scalar_lea.vmem [#allocation2], %s197
        // Predicated region
        $region29: #{tpu_custom_call.1} parent=27 // pred_check
          %p199 = pneg %p64
        $region30: #{tpu_custom_call.1} parent=27 // pred_check_branch
          %201 = sbr.rel (%p199) target = $region32
        $region31: #{tpu_custom_call.1} parent=27 // pred_region
          %202 = dma.done %s195, 16384
        $region32: #{tpu_custom_call.1} parent=27 // pred_fallthru
          _
        %s203 = sand.u32 %s79, 1
        %s204 = scalar_lea.sflag [#allocation6], %s203
        %s205 = sand.u32 %s79, 1
        %s206 = smul.addr %s205, 2048
        %s207 = scalar_lea.vmem [#allocation5], %s206
        // Predicated region
        $region33: #{tpu_custom_call.1} parent=27 // pred_check
          %p208 = pneg %p92
        $region34: #{tpu_custom_call.1} parent=27 // pred_check_branch
          %210 = sbr.rel (%p208) target = $region36
        $region35: #{tpu_custom_call.1} parent=27 // pred_region
          %211 = dma.done %s204, 32768
        $region36: #{tpu_custom_call.1} parent=27 // pred_fallthru
          _
        %s212 = sand.u32 %s51, 1
        %s213 = scalar_lea.sflag [#allocation3], %s212
        %s214 = sand.u32 %s51, 1
        %s215 = smul.addr %s214, 1024
        %s216 = scalar_lea.vmem [#allocation2], %s215
        %p217 = pneg %p64
        %p218 = pneg %p61
        %s219 = sand.u32 %s79, 1
        %s220 = scalar_lea.sflag [#allocation6], %s219
        %s221 = sand.u32 %s79, 1
        %s222 = smul.addr %s221, 2048
        %s223 = scalar_lea.vmem [#allocation5], %s222
        %p224 = pneg %p92
        %p225 = pneg %p89
        %p226 = pneg %p120
        %p227 = pneg %p117
        %s228 = sand.u32 %s107, 1
        %s229 = scalar_lea.sflag [#allocation4], %s228
        %s230 = sand.u32 %s107, 1
        %s231 = smul.addr %s230, 1024
        %s232 = scalar_lea.vmem [#allocation7], %s231
        %s233 = smul.u32 32, %s27
        %s234 = smul.u32 4, %s29
        %s235 = smul.u32 64, %s29
        %s236 = smul.u32 4, %s28
        %s237 = smul.u32 32, %s27
        %s238 = smul.u32 4, %s28
        %p239 = scmp.eq.s32.totalorder %s29, 0
        // Predicated region
        $region37: #{tpu_custom_call.1} parent=27 // pred_check
          %p240 = pneg %p239
        $region38: #{tpu_custom_call.1} parent=27 // pred_check_branch
          %242 = sbr.rel (%p240) target = $region40
        $region39: #{tpu_custom_call.1} parent=27 // pred_region
          %243 = vst [vmem:[%s232] sm:$0xff] 0.0
          %244 = vst [vmem:[%s232 + $0x8] sm:$0xff] 0.0
          %245 = vst [vmem:[%s232 + $0x10] sm:$0xff] 0.0
          %246 = vst [vmem:[%s232 + $0x18] sm:$0xff] 0.0
          %247 = vst [vmem:[%s232 + $0x20] sm:$0xff] 0.0
          %248 = vst [vmem:[%s232 + $0x28] sm:$0xff] 0.0
          %249 = vst [vmem:[%s232 + $0x30] sm:$0xff] 0.0
          %250 = vst [vmem:[%s232 + $0x38] sm:$0xff] 0.0
          %251 = vst [vmem:[%s232 + $0x40] sm:$0xff] 0.0
          %252 = vst [vmem:[%s232 + $0x48] sm:$0xff] 0.0
          %253 = vst [vmem:[%s232 + $0x50] sm:$0xff] 0.0
          %254 = vst [vmem:[%s232 + $0x58] sm:$0xff] 0.0
          %255 = vst [vmem:[%s232 + $0x60] sm:$0xff] 0.0
          %256 = vst [vmem:[%s232 + $0x68] sm:$0xff] 0.0
          %257 = vst [vmem:[%s232 + $0x70] sm:$0xff] 0.0
          %258 = vst [vmem:[%s232 + $0x78] sm:$0xff] 0.0
          %259 = vst [vmem:[%s232 + $0x80] sm:$0xff] 0.0
          %260 = vst [vmem:[%s232 + $0x88] sm:$0xff] 0.0
          %261 = vst [vmem:[%s232 + $0x90] sm:$0xff] 0.0
          %262 = vst [vmem:[%s232 + $0x98] sm:$0xff] 0.0
          %263 = vst [vmem:[%s232 + $0xa0] sm:$0xff] 0.0
          %264 = vst [vmem:[%s232 + $0xa8] sm:$0xff] 0.0
          %265 = vst [vmem:[%s232 + $0xb0] sm:$0xff] 0.0
          %266 = vst [vmem:[%s232 + $0xb8] sm:$0xff] 0.0
          %267 = vst [vmem:[%s232 + $0xc0] sm:$0xff] 0.0
          %268 = vst [vmem:[%s232 + $0xc8] sm:$0xff] 0.0
          %269 = vst [vmem:[%s232 + $0xd0] sm:$0xff] 0.0
          %270 = vst [vmem:[%s232 + $0xd8] sm:$0xff] 0.0
          %271 = vst [vmem:[%s232 + $0xe0] sm:$0xff] 0.0
          %272 = vst [vmem:[%s232 + $0xe8] sm:$0xff] 0.0
          %273 = vst [vmem:[%s232 + $0xf0] sm:$0xff] 0.0
          %274 = vst [vmem:[%s232 + $0xf8] sm:$0xff] 0.0
          %275 = vst [vmem:[%s232 + $0x100] sm:$0xff] 0.0
          %276 = vst [vmem:[%s232 + $0x108] sm:$0xff] 0.0
          %277 = vst [vmem:[%s232 + $0x110] sm:$0xff] 0.0
          %278 = vst [vmem:[%s232 + $0x118] sm:$0xff] 0.0
          %279 = vst [vmem:[%s232 + $0x120] sm:$0xff] 0.0
          %280 = vst [vmem:[%s232 + $0x128] sm:$0xff] 0.0
          %281 = vst [vmem:[%s232 + $0x130] sm:$0xff] 0.0
          %282 = vst [vmem:[%s232 + $0x138] sm:$0xff] 0.0
          %283 = vst [vmem:[%s232 + $0x140] sm:$0xff] 0.0
          %284 = vst [vmem:[%s232 + $0x148] sm:$0xff] 0.0
          %285 = vst [vmem:[%s232 + $0x150] sm:$0xff] 0.0
          %286 = vst [vmem:[%s232 + $0x158] sm:$0xff] 0.0
          %287 = vst [vmem:[%s232 + $0x160] sm:$0xff] 0.0
          %288 = vst [vmem:[%s232 + $0x168] sm:$0xff] 0.0
          %289 = vst [vmem:[%s232 + $0x170] sm:$0xff] 0.0
          %290 = vst [vmem:[%s232 + $0x178] sm:$0xff] 0.0
          %291 = vst [vmem:[%s232 + $0x180] sm:$0xff] 0.0
          %292 = vst [vmem:[%s232 + $0x188] sm:$0xff] 0.0
          %293 = vst [vmem:[%s232 + $0x190] sm:$0xff] 0.0
          %294 = vst [vmem:[%s232 + $0x198] sm:$0xff] 0.0
          %295 = vst [vmem:[%s232 + $0x1a0] sm:$0xff] 0.0
          %296 = vst [vmem:[%s232 + $0x1a8] sm:$0xff] 0.0
          %297 = vst [vmem:[%s232 + $0x1b0] sm:$0xff] 0.0
          %298 = vst [vmem:[%s232 + $0x1b8] sm:$0xff] 0.0
          %299 = vst [vmem:[%s232 + $0x1c0] sm:$0xff] 0.0
          %300 = vst [vmem:[%s232 + $0x1c8] sm:$0xff] 0.0
          %301 = vst [vmem:[%s232 + $0x1d0] sm:$0xff] 0.0
          %302 = vst [vmem:[%s232 + $0x1d8] sm:$0xff] 0.0
          %303 = vst [vmem:[%s232 + $0x1e0] sm:$0xff] 0.0
          %304 = vst [vmem:[%s232 + $0x1e8] sm:$0xff] 0.0
          %305 = vst [vmem:[%s232 + $0x1f0] sm:$0xff] 0.0
          %306 = vst [vmem:[%s232 + $0x1f8] sm:$0xff] 0.0
          %307 = vst [vmem:[%s232 + $0x200] sm:$0xff] 0.0
          %308 = vst [vmem:[%s232 + $0x208] sm:$0xff] 0.0
          %309 = vst [vmem:[%s232 + $0x210] sm:$0xff] 0.0
          %310 = vst [vmem:[%s232 + $0x218] sm:$0xff] 0.0
          %311 = vst [vmem:[%s232 + $0x220] sm:$0xff] 0.0
          %312 = vst [vmem:[%s232 + $0x228] sm:$0xff] 0.0
          %313 = vst [vmem:[%s232 + $0x230] sm:$0xff] 0.0
          %314 = vst [vmem:[%s232 + $0x238] sm:$0xff] 0.0
          %315 = vst [vmem:[%s232 + $0x240] sm:$0xff] 0.0
          %316 = vst [vmem:[%s232 + $0x248] sm:$0xff] 0.0
          %317 = vst [vmem:[%s232 + $0x250] sm:$0xff] 0.0
          %318 = vst [vmem:[%s232 + $0x258] sm:$0xff] 0.0
          %319 = vst [vmem:[%s232 + $0x260] sm:$0xff] 0.0
          %320 = vst [vmem:[%s232 + $0x268] sm:$0xff] 0.0
          %321 = vst [vmem:[%s232 + $0x270] sm:$0xff] 0.0
          %322 = vst [vmem:[%s232 + $0x278] sm:$0xff] 0.0
          %323 = vst [vmem:[%s232 + $0x280] sm:$0xff] 0.0
          %324 = vst [vmem:[%s232 + $0x288] sm:$0xff] 0.0
          %325 = vst [vmem:[%s232 + $0x290] sm:$0xff] 0.0
          %326 = vst [vmem:[%s232 + $0x298] sm:$0xff] 0.0
          %327 = vst [vmem:[%s232 + $0x2a0] sm:$0xff] 0.0
          %328 = vst [vmem:[%s232 + $0x2a8] sm:$0xff] 0.0
          %329 = vst [vmem:[%s232 + $0x2b0] sm:$0xff] 0.0
          %330 = vst [vmem:[%s232 + $0x2b8] sm:$0xff] 0.0
          %331 = vst [vmem:[%s232 + $0x2c0] sm:$0xff] 0.0
          %332 = vst [vmem:[%s232 + $0x2c8] sm:$0xff] 0.0
          %333 = vst [vmem:[%s232 + $0x2d0] sm:$0xff] 0.0
          %334 = vst [vmem:[%s232 + $0x2d8] sm:$0xff] 0.0
          %335 = vst [vmem:[%s232 + $0x2e0] sm:$0xff] 0.0
          %336 = vst [vmem:[%s232 + $0x2e8] sm:$0xff] 0.0
          %337 = vst [vmem:[%s232 + $0x2f0] sm:$0xff] 0.0
          %338 = vst [vmem:[%s232 + $0x2f8] sm:$0xff] 0.0
          %339 = vst [vmem:[%s232 + $0x300] sm:$0xff] 0.0
          %340 = vst [vmem:[%s232 + $0x308] sm:$0xff] 0.0
          %341 = vst [vmem:[%s232 + $0x310] sm:$0xff] 0.0
          %342 = vst [vmem:[%s232 + $0x318] sm:$0xff] 0.0
          %343 = vst [vmem:[%s232 + $0x320] sm:$0xff] 0.0
          %344 = vst [vmem:[%s232 + $0x328] sm:$0xff] 0.0
          %345 = vst [vmem:[%s232 + $0x330] sm:$0xff] 0.0
          %346 = vst [vmem:[%s232 + $0x338] sm:$0xff] 0.0
          %347 = vst [vmem:[%s232 + $0x340] sm:$0xff] 0.0
          %348 = vst [vmem:[%s232 + $0x348] sm:$0xff] 0.0
          %349 = vst [vmem:[%s232 + $0x350] sm:$0xff] 0.0
          %350 = vst [vmem:[%s232 + $0x358] sm:$0xff] 0.0
          %351 = vst [vmem:[%s232 + $0x360] sm:$0xff] 0.0
          %352 = vst [vmem:[%s232 + $0x368] sm:$0xff] 0.0
          %353 = vst [vmem:[%s232 + $0x370] sm:$0xff] 0.0
          %354 = vst [vmem:[%s232 + $0x378] sm:$0xff] 0.0
          %355 = vst [vmem:[%s232 + $0x380] sm:$0xff] 0.0
          %356 = vst [vmem:[%s232 + $0x388] sm:$0xff] 0.0
          %357 = vst [vmem:[%s232 + $0x390] sm:$0xff] 0.0
          %358 = vst [vmem:[%s232 + $0x398] sm:$0xff] 0.0
          %359 = vst [vmem:[%s232 + $0x3a0] sm:$0xff] 0.0
          %360 = vst [vmem:[%s232 + $0x3a8] sm:$0xff] 0.0
          %361 = vst [vmem:[%s232 + $0x3b0] sm:$0xff] 0.0
          %362 = vst [vmem:[%s232 + $0x3b8] sm:$0xff] 0.0
          %363 = vst [vmem:[%s232 + $0x3c0] sm:$0xff] 0.0
          %364 = vst [vmem:[%s232 + $0x3c8] sm:$0xff] 0.0
          %365 = vst [vmem:[%s232 + $0x3d0] sm:$0xff] 0.0
          %366 = vst [vmem:[%s232 + $0x3d8] sm:$0xff] 0.0
          %367 = vst [vmem:[%s232 + $0x3e0] sm:$0xff] 0.0
          %368 = vst [vmem:[%s232 + $0x3e8] sm:$0xff] 0.0
          %369 = vst [vmem:[%s232 + $0x3f0] sm:$0xff] 0.0
          %370 = vst [vmem:[%s232 + $0x3f8] sm:$0xff] 0.0
        $region40: #{tpu_custom_call.1} parent=27 // pred_fallthru
          _
        %v371 = vld [vmem:[%s232] sm:$0xff]
        %v372 = vld [vmem:[%s232 + $0x8] sm:$0xff]
        %v373 = vld [vmem:[%s232 + $0x10] sm:$0xff]
        %v374 = vld [vmem:[%s232 + $0x18] sm:$0xff]
        %v375 = vld [vmem:[%s232 + $0x20] sm:$0xff]
        %v376 = vld [vmem:[%s232 + $0x28] sm:$0xff]
        %v377 = vld [vmem:[%s232 + $0x30] sm:$0xff]
        %v378 = vld [vmem:[%s232 + $0x38] sm:$0xff]
        %v379 = vld [vmem:[%s232 + $0x40] sm:$0xff]
        %v380 = vld [vmem:[%s232 + $0x48] sm:$0xff]
        %v381 = vld [vmem:[%s232 + $0x50] sm:$0xff]
        %v382 = vld [vmem:[%s232 + $0x58] sm:$0xff]
        %v383 = vld [vmem:[%s232 + $0x60] sm:$0xff]
        %v384 = vld [vmem:[%s232 + $0x68] sm:$0xff]
        %v385 = vld [vmem:[%s232 + $0x70] sm:$0xff]
        %v386 = vld [vmem:[%s232 + $0x78] sm:$0xff]
        %v387 = vld [vmem:[%s232 + $0x80] sm:$0xff]
        %v388 = vld [vmem:[%s232 + $0x88] sm:$0xff]
        %v389 = vld [vmem:[%s232 + $0x90] sm:$0xff]
        %v390 = vld [vmem:[%s232 + $0x98] sm:$0xff]
        %v391 = vld [vmem:[%s232 + $0xa0] sm:$0xff]
        %v392 = vld [vmem:[%s232 + $0xa8] sm:$0xff]
        %v393 = vld [vmem:[%s232 + $0xb0] sm:$0xff]
        %v394 = vld [vmem:[%s232 + $0xb8] sm:$0xff]
        %v395 = vld [vmem:[%s232 + $0xc0] sm:$0xff]
        %v396 = vld [vmem:[%s232 + $0xc8] sm:$0xff]
        %v397 = vld [vmem:[%s232 + $0xd0] sm:$0xff]
        %v398 = vld [vmem:[%s232 + $0xd8] sm:$0xff]
        %v399 = vld [vmem:[%s232 + $0xe0] sm:$0xff]
        %v400 = vld [vmem:[%s232 + $0xe8] sm:$0xff]
        %v401 = vld [vmem:[%s232 + $0xf0] sm:$0xff]
        %v402 = vld [vmem:[%s232 + $0xf8] sm:$0xff]
        %v403 = vld [vmem:[%s232 + $0x100] sm:$0xff]
        %v404 = vld [vmem:[%s232 + $0x108] sm:$0xff]
        %v405 = vld [vmem:[%s232 + $0x110] sm:$0xff]
        %v406 = vld [vmem:[%s232 + $0x118] sm:$0xff]
        %v407 = vld [vmem:[%s232 + $0x120] sm:$0xff]
        %v408 = vld [vmem:[%s232 + $0x128] sm:$0xff]
        %v409 = vld [vmem:[%s232 + $0x130] sm:$0xff]
        %v410 = vld [vmem:[%s232 + $0x138] sm:$0xff]
        %v411 = vld [vmem:[%s232 + $0x140] sm:$0xff]
        %v412 = vld [vmem:[%s232 + $0x148] sm:$0xff]
        %v413 = vld [vmem:[%s232 + $0x150] sm:$0xff]
        %v414 = vld [vmem:[%s232 + $0x158] sm:$0xff]
        %v415 = vld [vmem:[%s232 + $0x160] sm:$0xff]
        %v416 = vld [vmem:[%s232 + $0x168] sm:$0xff]
        %v417 = vld [vmem:[%s232 + $0x170] sm:$0xff]
        %v418 = vld [vmem:[%s232 + $0x178] sm:$0xff]
        %v419 = vld [vmem:[%s232 + $0x180] sm:$0xff]
        %v420 = vld [vmem:[%s232 + $0x188] sm:$0xff]
        %v421 = vld [vmem:[%s232 + $0x190] sm:$0xff]
        %v422 = vld [vmem:[%s232 + $0x198] sm:$0xff]
        %v423 = vld [vmem:[%s232 + $0x1a0] sm:$0xff]
        %v424 = vld [vmem:[%s232 + $0x1a8] sm:$0xff]
        %v425 = vld [vmem:[%s232 + $0x1b0] sm:$0xff]
        %v426 = vld [vmem:[%s232 + $0x1b8] sm:$0xff]
        %v427 = vld [vmem:[%s232 + $0x1c0] sm:$0xff]
        %v428 = vld [vmem:[%s232 + $0x1c8] sm:$0xff]
        %v429 = vld [vmem:[%s232 + $0x1d0] sm:$0xff]
        %v430 = vld [vmem:[%s232 + $0x1d8] sm:$0xff]
        %v431 = vld [vmem:[%s232 + $0x1e0] sm:$0xff]
        %v432 = vld [vmem:[%s232 + $0x1e8] sm:$0xff]
        %v433 = vld [vmem:[%s232 + $0x1f0] sm:$0xff]
        %v434 = vld [vmem:[%s232 + $0x1f8] sm:$0xff]
        %v435 = vld [vmem:[%s232 + $0x200] sm:$0xff]
        %v436 = vld [vmem:[%s232 + $0x208] sm:$0xff]
        %v437 = vld [vmem:[%s232 + $0x210] sm:$0xff]
        %v438 = vld [vmem:[%s232 + $0x218] sm:$0xff]
        %v439 = vld [vmem:[%s232 + $0x220] sm:$0xff]
        %v440 = vld [vmem:[%s232 + $0x228] sm:$0xff]
        %v441 = vld [vmem:[%s232 + $0x230] sm:$0xff]
        %v442 = vld [vmem:[%s232 + $0x238] sm:$0xff]
        %v443 = vld [vmem:[%s232 + $0x240] sm:$0xff]
        %v444 = vld [vmem:[%s232 + $0x248] sm:$0xff]
        %v445 = vld [vmem:[%s232 + $0x250] sm:$0xff]
        %v446 = vld [vmem:[%s232 + $0x258] sm:$0xff]
        %v447 = vld [vmem:[%s232 + $0x260] sm:$0xff]
        %v448 = vld [vmem:[%s232 + $0x268] sm:$0xff]
        %v449 = vld [vmem:[%s232 + $0x270] sm:$0xff]
        %v450 = vld [vmem:[%s232 + $0x278] sm:$0xff]
        %v451 = vld [vmem:[%s232 + $0x280] sm:$0xff]
        %v452 = vld [vmem:[%s232 + $0x288] sm:$0xff]
        %v453 = vld [vmem:[%s232 + $0x290] sm:$0xff]
        %v454 = vld [vmem:[%s232 + $0x298] sm:$0xff]
        %v455 = vld [vmem:[%s232 + $0x2a0] sm:$0xff]
        %v456 = vld [vmem:[%s232 + $0x2a8] sm:$0xff]
        %v457 = vld [vmem:[%s232 + $0x2b0] sm:$0xff]
        %v458 = vld [vmem:[%s232 + $0x2b8] sm:$0xff]
        %v459 = vld [vmem:[%s232 + $0x2c0] sm:$0xff]
        %v460 = vld [vmem:[%s232 + $0x2c8] sm:$0xff]
        %v461 = vld [vmem:[%s232 + $0x2d0] sm:$0xff]
        %v462 = vld [vmem:[%s232 + $0x2d8] sm:$0xff]
        %v463 = vld [vmem:[%s232 + $0x2e0] sm:$0xff]
        %v464 = vld [vmem:[%s232 + $0x2e8] sm:$0xff]
        %v465 = vld [vmem:[%s232 + $0x2f0] sm:$0xff]
        %v466 = vld [vmem:[%s232 + $0x2f8] sm:$0xff]
        %v467 = vld [vmem:[%s232 + $0x300] sm:$0xff]
        %v468 = vld [vmem:[%s232 + $0x308] sm:$0xff]
        %v469 = vld [vmem:[%s232 + $0x310] sm:$0xff]
        %v470 = vld [vmem:[%s232 + $0x318] sm:$0xff]
        %v471 = vld [vmem:[%s232 + $0x320] sm:$0xff]
        %v472 = vld [vmem:[%s232 + $0x328] sm:$0xff]
        %v473 = vld [vmem:[%s232 + $0x330] sm:$0xff]
        %v474 = vld [vmem:[%s232 + $0x338] sm:$0xff]
        %v475 = vld [vmem:[%s232 + $0x340] sm:$0xff]
        %v476 = vld [vmem:[%s232 + $0x348] sm:$0xff]
        %v477 = vld [vmem:[%s232 + $0x350] sm:$0xff]
        %v478 = vld [vmem:[%s232 + $0x358] sm:$0xff]
        %v479 = vld [vmem:[%s232 + $0x360] sm:$0xff]
        %v480 = vld [vmem:[%s232 + $0x368] sm:$0xff]
        %v481 = vld [vmem:[%s232 + $0x370] sm:$0xff]
        %v482 = vld [vmem:[%s232 + $0x378] sm:$0xff]
        %v483 = vld [vmem:[%s232 + $0x380] sm:$0xff]
        %v484 = vld [vmem:[%s232 + $0x388] sm:$0xff]
        %v485 = vld [vmem:[%s232 + $0x390] sm:$0xff]
        %v486 = vld [vmem:[%s232 + $0x398] sm:$0xff]
        %v487 = vld [vmem:[%s232 + $0x3a0] sm:$0xff]
        %v488 = vld [vmem:[%s232 + $0x3a8] sm:$0xff]
        %v489 = vld [vmem:[%s232 + $0x3b0] sm:$0xff]
        %v490 = vld [vmem:[%s232 + $0x3b8] sm:$0xff]
        %v491 = vld [vmem:[%s232 + $0x3c0] sm:$0xff]
        %v492 = vld [vmem:[%s232 + $0x3c8] sm:$0xff]
        %v493 = vld [vmem:[%s232 + $0x3d0] sm:$0xff]
        %v494 = vld [vmem:[%s232 + $0x3d8] sm:$0xff]
        %v495 = vld [vmem:[%s232 + $0x3e0] sm:$0xff]
        %v496 = vld [vmem:[%s232 + $0x3e8] sm:$0xff]
        %v497 = vld [vmem:[%s232 + $0x3f0] sm:$0xff]
        %v498 = vld [vmem:[%s232 + $0x3f8] sm:$0xff]
        %v499 = vld [vmem:[%s198] sm:$0xff]
        %v500 = vld [vmem:[%s198 + $0x8] sm:$0xff]
        %v501 = vld [vmem:[%s198 + $0x10] sm:$0xff]
        %v502 = vld [vmem:[%s198 + $0x18] sm:$0xff]
        %v503 = vld [vmem:[%s198 + $0x20] sm:$0xff]
        %v504 = vld [vmem:[%s198 + $0x28] sm:$0xff]
        %v505 = vld [vmem:[%s198 + $0x30] sm:$0xff]
        %v506 = vld [vmem:[%s198 + $0x38] sm:$0xff]
        %v507 = vld [vmem:[%s198 + $0x40] sm:$0xff]
        %v508 = vld [vmem:[%s198 + $0x48] sm:$0xff]
        %v509 = vld [vmem:[%s198 + $0x50] sm:$0xff]
        %v510 = vld [vmem:[%s198 + $0x58] sm:$0xff]
        %v511 = vld [vmem:[%s198 + $0x60] sm:$0xff]
        %v512 = vld [vmem:[%s198 + $0x68] sm:$0xff]
        %v513 = vld [vmem:[%s198 + $0x70] sm:$0xff]
        %v514 = vld [vmem:[%s198 + $0x78] sm:$0xff]
        %v515 = vld [vmem:[%s198 + $0x80] sm:$0xff]
        %v516 = vld [vmem:[%s198 + $0x88] sm:$0xff]
        %v517 = vld [vmem:[%s198 + $0x90] sm:$0xff]
        %v518 = vld [vmem:[%s198 + $0x98] sm:$0xff]
        %v519 = vld [vmem:[%s198 + $0xa0] sm:$0xff]
        %v520 = vld [vmem:[%s198 + $0xa8] sm:$0xff]
        %v521 = vld [vmem:[%s198 + $0xb0] sm:$0xff]
        %v522 = vld [vmem:[%s198 + $0xb8] sm:$0xff]
        %v523 = vld [vmem:[%s198 + $0xc0] sm:$0xff]
        %v524 = vld [vmem:[%s198 + $0xc8] sm:$0xff]
        %v525 = vld [vmem:[%s198 + $0xd0] sm:$0xff]
        %v526 = vld [vmem:[%s198 + $0xd8] sm:$0xff]
        %v527 = vld [vmem:[%s198 + $0xe0] sm:$0xff]
        %v528 = vld [vmem:[%s198 + $0xe8] sm:$0xff]
        %v529 = vld [vmem:[%s198 + $0xf0] sm:$0xff]
        %v530 = vld [vmem:[%s198 + $0xf8] sm:$0xff]
        %v531 = vld [vmem:[%s198 + $0x100] sm:$0xff]
        %v532 = vld [vmem:[%s198 + $0x108] sm:$0xff]
        %v533 = vld [vmem:[%s198 + $0x110] sm:$0xff]
        %v534 = vld [vmem:[%s198 + $0x118] sm:$0xff]
        %v535 = vld [vmem:[%s198 + $0x120] sm:$0xff]
        %v536 = vld [vmem:[%s198 + $0x128] sm:$0xff]
        %v537 = vld [vmem:[%s198 + $0x130] sm:$0xff]
        %v538 = vld [vmem:[%s198 + $0x138] sm:$0xff]
        %v539 = vld [vmem:[%s198 + $0x140] sm:$0xff]
        %v540 = vld [vmem:[%s198 + $0x148] sm:$0xff]
        %v541 = vld [vmem:[%s198 + $0x150] sm:$0xff]
        %v542 = vld [vmem:[%s198 + $0x158] sm:$0xff]
        %v543 = vld [vmem:[%s198 + $0x160] sm:$0xff]
        %v544 = vld [vmem:[%s198 + $0x168] sm:$0xff]
        %v545 = vld [vmem:[%s198 + $0x170] sm:$0xff]
        %v546 = vld [vmem:[%s198 + $0x178] sm:$0xff]
        %v547 = vld [vmem:[%s198 + $0x180] sm:$0xff]
        %v548 = vld [vmem:[%s198 + $0x188] sm:$0xff]
        %v549 = vld [vmem:[%s198 + $0x190] sm:$0xff]
        %v550 = vld [vmem:[%s198 + $0x198] sm:$0xff]
        %v551 = vld [vmem:[%s198 + $0x1a0] sm:$0xff]
        %v552 = vld [vmem:[%s198 + $0x1a8] sm:$0xff]
        %v553 = vld [vmem:[%s198 + $0x1b0] sm:$0xff]
        %v554 = vld [vmem:[%s198 + $0x1b8] sm:$0xff]
        %v555 = vld [vmem:[%s198 + $0x1c0] sm:$0xff]
        %v556 = vld [vmem:[%s198 + $0x1c8] sm:$0xff]
        %v557 = vld [vmem:[%s198 + $0x1d0] sm:$0xff]
        %v558 = vld [vmem:[%s198 + $0x1d8] sm:$0xff]
        %v559 = vld [vmem:[%s198 + $0x1e0] sm:$0xff]
        %v560 = vld [vmem:[%s198 + $0x1e8] sm:$0xff]
        %v561 = vld [vmem:[%s198 + $0x1f0] sm:$0xff]
        %v562 = vld [vmem:[%s198 + $0x1f8] sm:$0xff]
        %v563 = vld [vmem:[%s198 + $0x200] sm:$0xff]
        %v564 = vld [vmem:[%s198 + $0x208] sm:$0xff]
        %v565 = vld [vmem:[%s198 + $0x210] sm:$0xff]
        %v566 = vld [vmem:[%s198 + $0x218] sm:$0xff]
        %v567 = vld [vmem:[%s198 + $0x220] sm:$0xff]
        %v568 = vld [vmem:[%s198 + $0x228] sm:$0xff]
        %v569 = vld [vmem:[%s198 + $0x230] sm:$0xff]
        %v570 = vld [vmem:[%s198 + $0x238] sm:$0xff]
        %v571 = vld [vmem:[%s198 + $0x240] sm:$0xff]
        %v572 = vld [vmem:[%s198 + $0x248] sm:$0xff]
        %v573 = vld [vmem:[%s198 + $0x250] sm:$0xff]
        %v574 = vld [vmem:[%s198 + $0x258] sm:$0xff]
        %v575 = vld [vmem:[%s198 + $0x260] sm:$0xff]
        %v576 = vld [vmem:[%s198 + $0x268] sm:$0xff]
        %v577 = vld [vmem:[%s198 + $0x270] sm:$0xff]
        %v578 = vld [vmem:[%s198 + $0x278] sm:$0xff]
        %v579 = vld [vmem:[%s198 + $0x280] sm:$0xff]
        %v580 = vld [vmem:[%s198 + $0x288] sm:$0xff]
        %v581 = vld [vmem:[%s198 + $0x290] sm:$0xff]
        %v582 = vld [vmem:[%s198 + $0x298] sm:$0xff]
        %v583 = vld [vmem:[%s198 + $0x2a0] sm:$0xff]
        %v584 = vld [vmem:[%s198 + $0x2a8] sm:$0xff]
        %v585 = vld [vmem:[%s198 + $0x2b0] sm:$0xff]
        %v586 = vld [vmem:[%s198 + $0x2b8] sm:$0xff]
        %v587 = vld [vmem:[%s198 + $0x2c0] sm:$0xff]
        %v588 = vld [vmem:[%s198 + $0x2c8] sm:$0xff]
        %v589 = vld [vmem:[%s198 + $0x2d0] sm:$0xff]
        %v590 = vld [vmem:[%s198 + $0x2d8] sm:$0xff]
        %v591 = vld [vmem:[%s198 + $0x2e0] sm:$0xff]
        %v592 = vld [vmem:[%s198 + $0x2e8] sm:$0xff]
        %v593 = vld [vmem:[%s198 + $0x2f0] sm:$0xff]
        %v594 = vld [vmem:[%s198 + $0x2f8] sm:$0xff]
        %v595 = vld [vmem:[%s198 + $0x300] sm:$0xff]
        %v596 = vld [vmem:[%s198 + $0x308] sm:$0xff]
        %v597 = vld [vmem:[%s198 + $0x310] sm:$0xff]
        %v598 = vld [vmem:[%s198 + $0x318] sm:$0xff]
        %v599 = vld [vmem:[%s198 + $0x320] sm:$0xff]
        %v600 = vld [vmem:[%s198 + $0x328] sm:$0xff]
        %v601 = vld [vmem:[%s198 + $0x330] sm:$0xff]
        %v602 = vld [vmem:[%s198 + $0x338] sm:$0xff]
        %v603 = vld [vmem:[%s198 + $0x340] sm:$0xff]
        %v604 = vld [vmem:[%s198 + $0x348] sm:$0xff]
        %v605 = vld [vmem:[%s198 + $0x350] sm:$0xff]
        %v606 = vld [vmem:[%s198 + $0x358] sm:$0xff]
        %v607 = vld [vmem:[%s198 + $0x360] sm:$0xff]
        %v608 = vld [vmem:[%s198 + $0x368] sm:$0xff]
        %v609 = vld [vmem:[%s198 + $0x370] sm:$0xff]
        %v610 = vld [vmem:[%s198 + $0x378] sm:$0xff]
        %v611 = vld [vmem:[%s198 + $0x380] sm:$0xff]
        %v612 = vld [vmem:[%s198 + $0x388] sm:$0xff]
        %v613 = vld [vmem:[%s198 + $0x390] sm:$0xff]
        %v614 = vld [vmem:[%s198 + $0x398] sm:$0xff]
        %v615 = vld [vmem:[%s198 + $0x3a0] sm:$0xff]
        %v616 = vld [vmem:[%s198 + $0x3a8] sm:$0xff]
        %v617 = vld [vmem:[%s198 + $0x3b0] sm:$0xff]
        %v618 = vld [vmem:[%s198 + $0x3b8] sm:$0xff]
        %v619 = vld [vmem:[%s198 + $0x3c0] sm:$0xff]
        %v620 = vld [vmem:[%s198 + $0x3c8] sm:$0xff]
        %v621 = vld [vmem:[%s198 + $0x3d0] sm:$0xff]
        %v622 = vld [vmem:[%s198 + $0x3d8] sm:$0xff]
        %v623 = vld [vmem:[%s198 + $0x3e0] sm:$0xff]
        %v624 = vld [vmem:[%s198 + $0x3e8] sm:$0xff]
        %v625 = vld [vmem:[%s198 + $0x3f0] sm:$0xff]
        %v626 = vld [vmem:[%s198 + $0x3f8] sm:$0xff]
        %v627 = vld [vmem:[%s207] sm:$0xff]
        %v628 = vld [vmem:[%s207 + $0x8] sm:$0xff]
        %v629 = vld [vmem:[%s207 + $0x10] sm:$0xff]
        %v630 = vld [vmem:[%s207 + $0x18] sm:$0xff]
        %v631 = vld [vmem:[%s207 + $0x20] sm:$0xff]
        %v632 = vld [vmem:[%s207 + $0x28] sm:$0xff]
        %v633 = vld [vmem:[%s207 + $0x30] sm:$0xff]
        %v634 = vld [vmem:[%s207 + $0x38] sm:$0xff]
        %v635 = vld [vmem:[%s207 + $0x40] sm:$0xff]
        %v636 = vld [vmem:[%s207 + $0x48] sm:$0xff]
        %v637 = vld [vmem:[%s207 + $0x50] sm:$0xff]
        %v638 = vld [vmem:[%s207 + $0x58] sm:$0xff]
        %v639 = vld [vmem:[%s207 + $0x60] sm:$0xff]
        %v640 = vld [vmem:[%s207 + $0x68] sm:$0xff]
        %v641 = vld [vmem:[%s207 + $0x70] sm:$0xff]
        %v642 = vld [vmem:[%s207 + $0x78] sm:$0xff]
        %v643 = vld [vmem:[%s207 + $0x80] sm:$0xff]
        %v644 = vld [vmem:[%s207 + $0x88] sm:$0xff]
        %v645 = vld [vmem:[%s207 + $0x90] sm:$0xff]
        %v646 = vld [vmem:[%s207 + $0x98] sm:$0xff]
        %v647 = vld [vmem:[%s207 + $0xa0] sm:$0xff]
        %v648 = vld [vmem:[%s207 + $0xa8] sm:$0xff]
        %v649 = vld [vmem:[%s207 + $0xb0] sm:$0xff]
        %v650 = vld [vmem:[%s207 + $0xb8] sm:$0xff]
        %v651 = vld [vmem:[%s207 + $0xc0] sm:$0xff]
        %v652 = vld [vmem:[%s207 + $0xc8] sm:$0xff]
        %v653 = vld [vmem:[%s207 + $0xd0] sm:$0xff]
        %v654 = vld [vmem:[%s207 + $0xd8] sm:$0xff]
        %v655 = vld [vmem:[%s207 + $0xe0] sm:$0xff]
        %v656 = vld [vmem:[%s207 + $0xe8] sm:$0xff]
        %v657 = vld [vmem:[%s207 + $0xf0] sm:$0xff]
        %v658 = vld [vmem:[%s207 + $0xf8] sm:$0xff]
        %v659 = vld [vmem:[%s207 + $0x100] sm:$0xff]
        %v660 = vld [vmem:[%s207 + $0x108] sm:$0xff]
        %v661 = vld [vmem:[%s207 + $0x110] sm:$0xff]
        %v662 = vld [vmem:[%s207 + $0x118] sm:$0xff]
        %v663 = vld [vmem:[%s207 + $0x120] sm:$0xff]
        %v664 = vld [vmem:[%s207 + $0x128] sm:$0xff]
        %v665 = vld [vmem:[%s207 + $0x130] sm:$0xff]
        %v666 = vld [vmem:[%s207 + $0x138] sm:$0xff]
        %v667 = vld [vmem:[%s207 + $0x140] sm:$0xff]
        %v668 = vld [vmem:[%s207 + $0x148] sm:$0xff]
        %v669 = vld [vmem:[%s207 + $0x150] sm:$0xff]
        %v670 = vld [vmem:[%s207 + $0x158] sm:$0xff]
        %v671 = vld [vmem:[%s207 + $0x160] sm:$0xff]
        %v672 = vld [vmem:[%s207 + $0x168] sm:$0xff]
        %v673 = vld [vmem:[%s207 + $0x170] sm:$0xff]
        %v674 = vld [vmem:[%s207 + $0x178] sm:$0xff]
        %v675 = vld [vmem:[%s207 + $0x180] sm:$0xff]
        %v676 = vld [vmem:[%s207 + $0x188] sm:$0xff]
        %v677 = vld [vmem:[%s207 + $0x190] sm:$0xff]
        %v678 = vld [vmem:[%s207 + $0x198] sm:$0xff]
        %v679 = vld [vmem:[%s207 + $0x1a0] sm:$0xff]
        %v680 = vld [vmem:[%s207 + $0x1a8] sm:$0xff]
        %v681 = vld [vmem:[%s207 + $0x1b0] sm:$0xff]
        %v682 = vld [vmem:[%s207 + $0x1b8] sm:$0xff]
        %v683 = vld [vmem:[%s207 + $0x1c0] sm:$0xff]
        %v684 = vld [vmem:[%s207 + $0x1c8] sm:$0xff]
        %v685 = vld [vmem:[%s207 + $0x1d0] sm:$0xff]
        %v686 = vld [vmem:[%s207 + $0x1d8] sm:$0xff]
        %v687 = vld [vmem:[%s207 + $0x1e0] sm:$0xff]
        %v688 = vld [vmem:[%s207 + $0x1e8] sm:$0xff]
        %v689 = vld [vmem:[%s207 + $0x1f0] sm:$0xff]
        %v690 = vld [vmem:[%s207 + $0x1f8] sm:$0xff]
        %v691 = vld [vmem:[%s207 + $0x200] sm:$0xff]
        %v692 = vld [vmem:[%s207 + $0x208] sm:$0xff]
        %v693 = vld [vmem:[%s207 + $0x210] sm:$0xff]
        %v694 = vld [vmem:[%s207 + $0x218] sm:$0xff]
        %v695 = vld [vmem:[%s207 + $0x220] sm:$0xff]
        %v696 = vld [vmem:[%s207 + $0x228] sm:$0xff]
        %v697 = vld [vmem:[%s207 + $0x230] sm:$0xff]
        %v698 = vld [vmem:[%s207 + $0x238] sm:$0xff]
        %v699 = vld [vmem:[%s207 + $0x240] sm:$0xff]
        %v700 = vld [vmem:[%s207 + $0x248] sm:$0xff]
        %v701 = vld [vmem:[%s207 + $0x250] sm:$0xff]
        %v702 = vld [vmem:[%s207 + $0x258] sm:$0xff]
        %v703 = vld [vmem:[%s207 + $0x260] sm:$0xff]
        %v704 = vld [vmem:[%s207 + $0x268] sm:$0xff]
        %v705 = vld [vmem:[%s207 + $0x270] sm:$0xff]
        %v706 = vld [vmem:[%s207 + $0x278] sm:$0xff]
        %v707 = vld [vmem:[%s207 + $0x280] sm:$0xff]
        %v708 = vld [vmem:[%s207 + $0x288] sm:$0xff]
        %v709 = vld [vmem:[%s207 + $0x290] sm:$0xff]
        %v710 = vld [vmem:[%s207 + $0x298] sm:$0xff]
        %v711 = vld [vmem:[%s207 + $0x2a0] sm:$0xff]
        %v712 = vld [vmem:[%s207 + $0x2a8] sm:$0xff]
        %v713 = vld [vmem:[%s207 + $0x2b0] sm:$0xff]
        %v714 = vld [vmem:[%s207 + $0x2b8] sm:$0xff]
        %v715 = vld [vmem:[%s207 + $0x2c0] sm:$0xff]
        %v716 = vld [vmem:[%s207 + $0x2c8] sm:$0xff]
        %v717 = vld [vmem:[%s207 + $0x2d0] sm:$0xff]
        %v718 = vld [vmem:[%s207 + $0x2d8] sm:$0xff]
        %v719 = vld [vmem:[%s207 + $0x2e0] sm:$0xff]
        %v720 = vld [vmem:[%s207 + $0x2e8] sm:$0xff]
        %v721 = vld [vmem:[%s207 + $0x2f0] sm:$0xff]
        %v722 = vld [vmem:[%s207 + $0x2f8] sm:$0xff]
        %v723 = vld [vmem:[%s207 + $0x300] sm:$0xff]
        %v724 = vld [vmem:[%s207 + $0x308] sm:$0xff]
        %v725 = vld [vmem:[%s207 + $0x310] sm:$0xff]
        %v726 = vld [vmem:[%s207 + $0x318] sm:$0xff]
        %v727 = vld [vmem:[%s207 + $0x320] sm:$0xff]
        %v728 = vld [vmem:[%s207 + $0x328] sm:$0xff]
        %v729 = vld [vmem:[%s207 + $0x330] sm:$0xff]
        %v730 = vld [vmem:[%s207 + $0x338] sm:$0xff]
        %v731 = vld [vmem:[%s207 + $0x340] sm:$0xff]
        %v732 = vld [vmem:[%s207 + $0x348] sm:$0xff]
        %v733 = vld [vmem:[%s207 + $0x350] sm:$0xff]
        %v734 = vld [vmem:[%s207 + $0x358] sm:$0xff]
        %v735 = vld [vmem:[%s207 + $0x360] sm:$0xff]
        %v736 = vld [vmem:[%s207 + $0x368] sm:$0xff]
        %v737 = vld [vmem:[%s207 + $0x370] sm:$0xff]
        %v738 = vld [vmem:[%s207 + $0x378] sm:$0xff]
        %v739 = vld [vmem:[%s207 + $0x380] sm:$0xff]
        %v740 = vld [vmem:[%s207 + $0x388] sm:$0xff]
        %v741 = vld [vmem:[%s207 + $0x390] sm:$0xff]
        %v742 = vld [vmem:[%s207 + $0x398] sm:$0xff]
        %v743 = vld [vmem:[%s207 + $0x3a0] sm:$0xff]
        %v744 = vld [vmem:[%s207 + $0x3a8] sm:$0xff]
        %v745 = vld [vmem:[%s207 + $0x3b0] sm:$0xff]
        %v746 = vld [vmem:[%s207 + $0x3b8] sm:$0xff]
        %v747 = vld [vmem:[%s207 + $0x3c0] sm:$0xff]
        %v748 = vld [vmem:[%s207 + $0x3c8] sm:$0xff]
        %v749 = vld [vmem:[%s207 + $0x3d0] sm:$0xff]
        %v750 = vld [vmem:[%s207 + $0x3d8] sm:$0xff]
        %v751 = vld [vmem:[%s207 + $0x3e0] sm:$0xff]
        %v752 = vld [vmem:[%s207 + $0x3e8] sm:$0xff]
        %v753 = vld [vmem:[%s207 + $0x3f0] sm:$0xff]
        %v754 = vld [vmem:[%s207 + $0x3f8] sm:$0xff]
        %v755 = vld [vmem:[%s207 + $0x400] sm:$0xff]
        %v756 = vld [vmem:[%s207 + $0x408] sm:$0xff]
        %v757 = vld [vmem:[%s207 + $0x410] sm:$0xff]
        %v758 = vld [vmem:[%s207 + $0x418] sm:$0xff]
        %v759 = vld [vmem:[%s207 + $0x420] sm:$0xff]
        %v760 = vld [vmem:[%s207 + $0x428] sm:$0xff]
        %v761 = vld [vmem:[%s207 + $0x430] sm:$0xff]
        %v762 = vld [vmem:[%s207 + $0x438] sm:$0xff]
        %v763 = vld [vmem:[%s207 + $0x440] sm:$0xff]
        %v764 = vld [vmem:[%s207 + $0x448] sm:$0xff]
        %v765 = vld [vmem:[%s207 + $0x450] sm:$0xff]
        %v766 = vld [vmem:[%s207 + $0x458] sm:$0xff]
        %v767 = vld [vmem:[%s207 + $0x460] sm:$0xff]
        %v768 = vld [vmem:[%s207 + $0x468] sm:$0xff]
        %v769 = vld [vmem:[%s207 + $0x470] sm:$0xff]
        %v770 = vld [vmem:[%s207 + $0x478] sm:$0xff]
        %v771 = vld [vmem:[%s207 + $0x480] sm:$0xff]
        %v772 = vld [vmem:[%s207 + $0x488] sm:$0xff]
        %v773 = vld [vmem:[%s207 + $0x490] sm:$0xff]
        %v774 = vld [vmem:[%s207 + $0x498] sm:$0xff]
        %v775 = vld [vmem:[%s207 + $0x4a0] sm:$0xff]
        %v776 = vld [vmem:[%s207 + $0x4a8] sm:$0xff]
        %v777 = vld [vmem:[%s207 + $0x4b0] sm:$0xff]
        %v778 = vld [vmem:[%s207 + $0x4b8] sm:$0xff]
        %v779 = vld [vmem:[%s207 + $0x4c0] sm:$0xff]
        %v780 = vld [vmem:[%s207 + $0x4c8] sm:$0xff]
        %v781 = vld [vmem:[%s207 + $0x4d0] sm:$0xff]
        %v782 = vld [vmem:[%s207 + $0x4d8] sm:$0xff]
        %v783 = vld [vmem:[%s207 + $0x4e0] sm:$0xff]
        %v784 = vld [vmem:[%s207 + $0x4e8] sm:$0xff]
        %v785 = vld [vmem:[%s207 + $0x4f0] sm:$0xff]
        %v786 = vld [vmem:[%s207 + $0x4f8] sm:$0xff]
        %v787 = vld [vmem:[%s207 + $0x500] sm:$0xff]
        %v788 = vld [vmem:[%s207 + $0x508] sm:$0xff]
        %v789 = vld [vmem:[%s207 + $0x510] sm:$0xff]
        %v790 = vld [vmem:[%s207 + $0x518] sm:$0xff]
        %v791 = vld [vmem:[%s207 + $0x520] sm:$0xff]
        %v792 = vld [vmem:[%s207 + $0x528] sm:$0xff]
        %v793 = vld [vmem:[%s207 + $0x530] sm:$0xff]
        %v794 = vld [vmem:[%s207 + $0x538] sm:$0xff]
        %v795 = vld [vmem:[%s207 + $0x540] sm:$0xff]
        %v796 = vld [vmem:[%s207 + $0x548] sm:$0xff]
        %v797 = vld [vmem:[%s207 + $0x550] sm:$0xff]
        %v798 = vld [vmem:[%s207 + $0x558] sm:$0xff]
        %v799 = vld [vmem:[%s207 + $0x560] sm:$0xff]
        %v800 = vld [vmem:[%s207 + $0x568] sm:$0xff]
        %v801 = vld [vmem:[%s207 + $0x570] sm:$0xff]
        %v802 = vld [vmem:[%s207 + $0x578] sm:$0xff]
        %v803 = vld [vmem:[%s207 + $0x580] sm:$0xff]
        %v804 = vld [vmem:[%s207 + $0x588] sm:$0xff]
        %v805 = vld [vmem:[%s207 + $0x590] sm:$0xff]
        %v806 = vld [vmem:[%s207 + $0x598] sm:$0xff]
        %v807 = vld [vmem:[%s207 + $0x5a0] sm:$0xff]
        %v808 = vld [vmem:[%s207 + $0x5a8] sm:$0xff]
        %v809 = vld [vmem:[%s207 + $0x5b0] sm:$0xff]
        %v810 = vld [vmem:[%s207 + $0x5b8] sm:$0xff]
        %v811 = vld [vmem:[%s207 + $0x5c0] sm:$0xff]
        %v812 = vld [vmem:[%s207 + $0x5c8] sm:$0xff]
        %v813 = vld [vmem:[%s207 + $0x5d0] sm:$0xff]
        %v814 = vld [vmem:[%s207 + $0x5d8] sm:$0xff]
        %v815 = vld [vmem:[%s207 + $0x5e0] sm:$0xff]
        %v816 = vld [vmem:[%s207 + $0x5e8] sm:$0xff]
        %v817 = vld [vmem:[%s207 + $0x5f0] sm:$0xff]
        %v818 = vld [vmem:[%s207 + $0x5f8] sm:$0xff]
        %v819 = vld [vmem:[%s207 + $0x600] sm:$0xff]
        %v820 = vld [vmem:[%s207 + $0x608] sm:$0xff]
        %v821 = vld [vmem:[%s207 + $0x610] sm:$0xff]
        %v822 = vld [vmem:[%s207 + $0x618] sm:$0xff]
        %v823 = vld [vmem:[%s207 + $0x620] sm:$0xff]
        %v824 = vld [vmem:[%s207 + $0x628] sm:$0xff]
        %v825 = vld [vmem:[%s207 + $0x630] sm:$0xff]
        %v826 = vld [vmem:[%s207 + $0x638] sm:$0xff]
        %v827 = vld [vmem:[%s207 + $0x640] sm:$0xff]
        %v828 = vld [vmem:[%s207 + $0x648] sm:$0xff]
        %v829 = vld [vmem:[%s207 + $0x650] sm:$0xff]
        %v830 = vld [vmem:[%s207 + $0x658] sm:$0xff]
        %v831 = vld [vmem:[%s207 + $0x660] sm:$0xff]
        %v832 = vld [vmem:[%s207 + $0x668] sm:$0xff]
        %v833 = vld [vmem:[%s207 + $0x670] sm:$0xff]
        %v834 = vld [vmem:[%s207 + $0x678] sm:$0xff]
        %v835 = vld [vmem:[%s207 + $0x680] sm:$0xff]
        %v836 = vld [vmem:[%s207 + $0x688] sm:$0xff]
        %v837 = vld [vmem:[%s207 + $0x690] sm:$0xff]
        %v838 = vld [vmem:[%s207 + $0x698] sm:$0xff]
        %v839 = vld [vmem:[%s207 + $0x6a0] sm:$0xff]
        %v840 = vld [vmem:[%s207 + $0x6a8] sm:$0xff]
        %v841 = vld [vmem:[%s207 + $0x6b0] sm:$0xff]
        %v842 = vld [vmem:[%s207 + $0x6b8] sm:$0xff]
        %v843 = vld [vmem:[%s207 + $0x6c0] sm:$0xff]
        %v844 = vld [vmem:[%s207 + $0x6c8] sm:$0xff]
        %v845 = vld [vmem:[%s207 + $0x6d0] sm:$0xff]
        %v846 = vld [vmem:[%s207 + $0x6d8] sm:$0xff]
        %v847 = vld [vmem:[%s207 + $0x6e0] sm:$0xff]
        %v848 = vld [vmem:[%s207 + $0x6e8] sm:$0xff]
        %v849 = vld [vmem:[%s207 + $0x6f0] sm:$0xff]
        %v850 = vld [vmem:[%s207 + $0x6f8] sm:$0xff]
        %v851 = vld [vmem:[%s207 + $0x700] sm:$0xff]
        %v852 = vld [vmem:[%s207 + $0x708] sm:$0xff]
        %v853 = vld [vmem:[%s207 + $0x710] sm:$0xff]
        %v854 = vld [vmem:[%s207 + $0x718] sm:$0xff]
        %v855 = vld [vmem:[%s207 + $0x720] sm:$0xff]
        %v856 = vld [vmem:[%s207 + $0x728] sm:$0xff]
        %v857 = vld [vmem:[%s207 + $0x730] sm:$0xff]
        %v858 = vld [vmem:[%s207 + $0x738] sm:$0xff]
        %v859 = vld [vmem:[%s207 + $0x740] sm:$0xff]
        %v860 = vld [vmem:[%s207 + $0x748] sm:$0xff]
        %v861 = vld [vmem:[%s207 + $0x750] sm:$0xff]
        %v862 = vld [vmem:[%s207 + $0x758] sm:$0xff]
        %v863 = vld [vmem:[%s207 + $0x760] sm:$0xff]
        %v864 = vld [vmem:[%s207 + $0x768] sm:$0xff]
        %v865 = vld [vmem:[%s207 + $0x770] sm:$0xff]
        %v866 = vld [vmem:[%s207 + $0x778] sm:$0xff]
        %v867 = vld [vmem:[%s207 + $0x780] sm:$0xff]
        %v868 = vld [vmem:[%s207 + $0x788] sm:$0xff]
        %v869 = vld [vmem:[%s207 + $0x790] sm:$0xff]
        %v870 = vld [vmem:[%s207 + $0x798] sm:$0xff]
        %v871 = vld [vmem:[%s207 + $0x7a0] sm:$0xff]
        %v872 = vld [vmem:[%s207 + $0x7a8] sm:$0xff]
        %v873 = vld [vmem:[%s207 + $0x7b0] sm:$0xff]
        %v874 = vld [vmem:[%s207 + $0x7b8] sm:$0xff]
        %v875 = vld [vmem:[%s207 + $0x7c0] sm:$0xff]
        %v876 = vld [vmem:[%s207 + $0x7c8] sm:$0xff]
        %v877 = vld [vmem:[%s207 + $0x7d0] sm:$0xff]
        %v878 = vld [vmem:[%s207 + $0x7d8] sm:$0xff]
        %v879 = vld [vmem:[%s207 + $0x7e0] sm:$0xff]
        %v880 = vld [vmem:[%s207 + $0x7e8] sm:$0xff]
        %v881 = vld [vmem:[%s207 + $0x7f0] sm:$0xff]
        %v882 = vld [vmem:[%s207 + $0x7f8] sm:$0xff]
        %883 = vmatprep.subr.mxu0 %v628
        %884 = vmatpush1.msra.mxu0 %v627
        %885 = vmatprep.subr.mxu0 %v632
        %886 = vmatpush1.msra.mxu0 %v631
        %887 = vmatprep.subr.mxu0 %v636
        %888 = vmatpush1.msra.mxu0 %v635
        %889 = vmatprep.subr.mxu0 %v640
        %890 = vmatpush1.msra.mxu0 %v639
        %891 = vmatprep.subr.mxu0 %v644
        %892 = vmatpush1.msra.mxu0 %v643
        %893 = vmatprep.subr.mxu0 %v648
        %894 = vmatpush1.msra.mxu0 %v647
        %895 = vmatprep.subr.mxu0 %v652
        %896 = vmatpush1.msra.mxu0 %v651
        %897 = vmatprep.subr.mxu0 %v656
        %898 = vmatpush1.msra.mxu0 %v655
        %899 = vmatprep.subr.mxu0 %v660
        %900 = vmatpush1.msra.mxu0 %v659
        %901 = vmatprep.subr.mxu0 %v664
        %902 = vmatpush1.msra.mxu0 %v663
        %903 = vmatprep.subr.mxu0 %v668
        %904 = vmatpush1.msra.mxu0 %v667
        %905 = vmatprep.subr.mxu0 %v672
        %906 = vmatpush1.msra.mxu0 %v671
        %907 = vmatprep.subr.mxu0 %v676
        %908 = vmatpush1.msra.mxu0 %v675
        %909 = vmatprep.subr.mxu0 %v680
        %910 = vmatpush1.msra.mxu0 %v679
        %911 = vmatprep.subr.mxu0 %v684
        %912 = vmatpush1.msra.mxu0 %v683
        %913 = vmatprep.subr.mxu0 %v688
        %914 = vmatpush1.msra.mxu0 %v687
        %915 = vmatprep.subr.mxu0 %v692
        %916 = vmatpush1.msra.mxu0 %v691
        %917 = vmatprep.subr.mxu0 %v696
        %918 = vmatpush1.msra.mxu0 %v695
        %919 = vmatprep.subr.mxu0 %v700
        %920 = vmatpush1.msra.mxu0 %v699
        %921 = vmatprep.subr.mxu0 %v704
        %922 = vmatpush1.msra.mxu0 %v703
        %923 = vmatprep.subr.mxu0 %v708
        %924 = vmatpush1.msra.mxu0 %v707
        %925 = vmatprep.subr.mxu0 %v712
        %926 = vmatpush1.msra.mxu0 %v711
        %927 = vmatprep.subr.mxu0 %v716
        %928 = vmatpush1.msra.mxu0 %v715
        %929 = vmatprep.subr.mxu0 %v720
        %930 = vmatpush1.msra.mxu0 %v719
        %931 = vmatprep.subr.mxu0 %v724
        %932 = vmatpush1.msra.mxu0 %v723
        %933 = vmatprep.subr.mxu0 %v728
        %934 = vmatpush1.msra.mxu0 %v727
        %935 = vmatprep.subr.mxu0 %v732
        %936 = vmatpush1.msra.mxu0 %v731
        %937 = vmatprep.subr.mxu0 %v736
        %938 = vmatpush1.msra.mxu0 %v735
        %939 = vmatprep.subr.mxu0 %v740
        %940 = vmatpush1.msra.mxu0 %v739
        %941 = vmatprep.subr.mxu0 %v744
        %942 = vmatpush1.msra.mxu0 %v743
        %943 = vmatprep.subr.mxu0 %v748
        %944 = vmatpush1.msra.mxu0 %v747
        %945 = vmatprep.subr.mxu0 %v752
        %946 = vmatpush1.msra.mxu0 %v751
        %947 = vmatprep.mubr.f32.mxu0 %v500
        %948 = vmatmul.mubr.f32.gmra.mrb[0].mxu0 %v499
        %v949 = vpop.f32.mrb[0].mxu0
        %v950 = vadd.f32 0.0, %v949
        %v951 = vpop.f32.mrb[0].mxu0
        %v952 = vadd.f32 0.0, %v951
        %953 = vmatprep.mubr.f32.mxu0 %v504
        %954 = vmatmul.mubr.f32.gmra.mrb[0].mxu0 %v503
        %v955 = vpop.f32.mrb[0].mxu0
        %v956 = vadd.f32 0.0, %v955
        %v957 = vpop.f32.mrb[0].mxu0
        %v958 = vadd.f32 0.0, %v957
        %959 = vmatprep.mubr.f32.mxu0 %v508
        %960 = vmatmul.mubr.f32.gmra.mrb[0].mxu0 %v507
        %v961 = vpop.f32.mrb[0].mxu0
        %v962 = vadd.f32 0.0, %v961
        %v963 = vpop.f32.mrb[0].mxu0
        %v964 = vadd.f32 0.0, %v963
        %965 = vmatprep.mubr.f32.mxu0 %v512
        %966 = vmatmul.mubr.f32.gmra.mrb[0].mxu0 %v511
        %v967 = vpop.f32.mrb[0].mxu0
        %v968 = vadd.f32 0.0, %v967
        %v969 = vpop.f32.mrb[0].mxu0
        %v970 = vadd.f32 0.0, %v969
        %971 = vmatprep.mubr.f32.mxu0 %v516
        %972 = vmatmul.mubr.f32.gmra.mrb[0].mxu0 %v515
        %v973 = vpop.f32.mrb[0].mxu0
        %v974 = vadd.f32 0.0, %v973
        %v975 = vpop.f32.mrb[0].mxu0
        %v976 = vadd.f32 0.0, %v975
        %977 = vmatprep.mubr.f32.mxu0 %v520
        %978 = vmatmul.mubr.f32.gmra.mrb[0].mxu0 %v519
        %v979 = vpop.f32.mrb[0].mxu0
        %v980 = vadd.f32 0.0, %v979
        %v981 = vpop.f32.mrb[0].mxu0
        %v982 = vadd.f32 0.0, %v981
        %983 = vmatprep.mubr.f32.mxu0 %v524
        %984 = vmatmul.mubr.f32.gmra.mrb[0].mxu0 %v523
        %v985 = vpop.f32.mrb[0].mxu0
        %v986 = vadd.f32 0.0, %v985
        %v987 = vpop.f32.mrb[0].mxu0
        %v988 = vadd.f32 0.0, %v987
        %989 = vmatprep.mubr.f32.mxu0 %v528
        %990 = vmatmul.mubr.f32.gmra.mrb[0].mxu0 %v527
        %v991 = vpop.f32.mrb[0].mxu0
        %v992 = vadd.f32 0.0, %v991
        %v993 = vpop.f32.mrb[0].mxu0
        %v994 = vadd.f32 0.0, %v993
        %995 = vmatprep.mubr.f32.mxu0 %v532
        %996 = vmatmul.mubr.f32.gmra.mrb[0].mxu0 %v531
        %v997 = vpop.f32.mrb[0].mxu0
        %v998 = vadd.f32 0.0, %v997
        %v999 = vpop.f32.mrb[0].mxu0
        %v1000 = vadd.f32 0.0, %v999
        %1001 = vmatprep.mubr.f32.mxu0 %v536
        %1002 = vmatmul.mubr.f32.gmra.mrb[0].mxu0 %v535
        %v1003 = vpop.f32.mrb[0].mxu0
        %v1004 = vadd.f32 0.0, %v1003
        %v1005 = vpop.f32.mrb[0].mxu0
        %v1006 = vadd.f32 0.0, %v1005
        %1007 = vmatprep.mubr.f32.mxu0 %v540
        %1008 = vmatmul.mubr.f32.gmra.mrb[0].mxu0 %v539
        %v1009 = vpop.f32.mrb[0].mxu0
        %v1010 = vadd.f32 0.0, %v1009
        %v1011 = vpop.f32.mrb[0].mxu0
        %v1012 = vadd.f32 0.0, %v1011
        %1013 = vmatprep.mubr.f32.mxu0 %v544
        %1014 = vmatmul.mubr.f32.gmra.mrb[0].mxu0 %v543
        %v1015 = vpop.f32.mrb[0].mxu0
        %v1016 = vadd.f32 0.0, %v1015
        %v1017 = vpop.f32.mrb[0].mxu0
        %v1018 = vadd.f32 0.0, %v1017
        %1019 = vmatprep.mubr.f32.mxu0 %v548
        %1020 = vmatmul.mubr.f32.gmra.mrb[0].mxu0 %v547
        %v1021 = vpop.f32.mrb[0].mxu0
        %v1022 = vadd.f32 0.0, %v1021
        %v1023 = vpop.f32.mrb[0].mxu0
        %v1024 = vadd.f32 0.0, %v1023
        %1025 = vmatprep.mubr.f32.mxu0 %v552
        %1026 = vmatmul.mubr.f32.gmra.mrb[0].mxu0 %v551
        %v1027 = vpop.f32.mrb[0].mxu0
        %v1028 = vadd.f32 0.0, %v1027
        %v1029 = vpop.f32.mrb[0].mxu0
        %v1030 = vadd.f32 0.0, %v1029
        %1031 = vmatprep.mubr.f32.mxu0 %v556
        %1032 = vmatmul.mubr.f32.gmra.mrb[0].mxu0 %v555
        %v1033 = vpop.f32.mrb[0].mxu0
        %v1034 = vadd.f32 0.0, %v1033
        %v1035 = vpop.f32.mrb[0].mxu0
        %v1036 = vadd.f32 0.0, %v1035
        %1037 = vmatprep.mubr.f32.mxu0 %v560
        %1038 = vmatmul.mubr.f32.gmra.mrb[0].mxu0 %v559
        %v1039 = vpop.f32.mrb[0].mxu0
        %v1040 = vadd.f32 0.0, %v1039
        %v1041 = vpop.f32.mrb[0].mxu0
        %v1042 = vadd.f32 0.0, %v1041
        %1043 = vmatprep.mubr.f32.mxu0 %v564
        %1044 = vmatmul.mubr.f32.gmra.mrb[0].mxu0 %v563
        %v1045 = vpop.f32.mrb[0].mxu0
        %v1046 = vadd.f32 0.0, %v1045
        %v1047 = vpop.f32.mrb[0].mxu0
        %v1048 = vadd.f32 0.0, %v1047
        %1049 = vmatprep.mubr.f32.mxu0 %v568
        %1050 = vmatmul.mubr.f32.gmra.mrb[0].mxu0 %v567
        %v1051 = vpop.f32.mrb[0].mxu0
        %v1052 = vadd.f32 0.0, %v1051
        %v1053 = vpop.f32.mrb[0].mxu0
        %v1054 = vadd.f32 0.0, %v1053
        %1055 = vmatprep.mubr.f32.mxu0 %v572
        %1056 = vmatmul.mubr.f32.gmra.mrb[0].mxu0 %v571
        %v1057 = vpop.f32.mrb[0].mxu0
        %v1058 = vadd.f32 0.0, %v1057
        %v1059 = vpop.f32.mrb[0].mxu0
        %v1060 = vadd.f32 0.0, %v1059
        %1061 = vmatprep.mubr.f32.mxu0 %v576
        %1062 = vmatmul.mubr.f32.gmra.mrb[0].mxu0 %v575
        %v1063 = vpop.f32.mrb[0].mxu0
        %v1064 = vadd.f32 0.0, %v1063
        %v1065 = vpop.f32.mrb[0].mxu0
        %v1066 = vadd.f32 0.0, %v1065
        %1067 = vmatprep.mubr.f32.mxu0 %v580
        %1068 = vmatmul.mubr.f32.gmra.mrb[0].mxu0 %v579
        %v1069 = vpop.f32.mrb[0].mxu0
        %v1070 = vadd.f32 0.0, %v1069
        %v1071 = vpop.f32.mrb[0].mxu0
        %v1072 = vadd.f32 0.0, %v1071
        %1073 = vmatprep.mubr.f32.mxu0 %v584
        %1074 = vmatmul.mubr.f32.gmra.mrb[0].mxu0 %v583
        %v1075 = vpop.f32.mrb[0].mxu0
        %v1076 = vadd.f32 0.0, %v1075
        %v1077 = vpop.f32.mrb[0].mxu0
        %v1078 = vadd.f32 0.0, %v1077
        %1079 = vmatprep.mubr.f32.mxu0 %v588
        %1080 = vmatmul.mubr.f32.gmra.mrb[0].mxu0 %v587
        %v1081 = vpop.f32.mrb[0].mxu0
        %v1082 = vadd.f32 0.0, %v1081
        %v1083 = vpop.f32.mrb[0].mxu0
        %v1084 = vadd.f32 0.0, %v1083
        %1085 = vmatprep.mubr.f32.mxu0 %v592
        %1086 = vmatmul.mubr.f32.gmra.mrb[0].mxu0 %v591
        %v1087 = vpop.f32.mrb[0].mxu0
        %v1088 = vadd.f32 0.0, %v1087
        %v1089 = vpop.f32.mrb[0].mxu0
        %v1090 = vadd.f32 0.0, %v1089
        %1091 = vmatprep.mubr.f32.mxu0 %v596
        %1092 = vmatmul.mubr.f32.gmra.mrb[0].mxu0 %v595
        %v1093 = vpop.f32.mrb[0].mxu0
        %v1094 = vadd.f32 0.0, %v1093
        %v1095 = vpop.f32.mrb[0].mxu0
        %v1096 = vadd.f32 0.0, %v1095
        %1097 = vmatprep.mubr.f32.mxu0 %v600
        %1098 = vmatmul.mubr.f32.gmra.mrb[0].mxu0 %v599
        %v1099 = vpop.f32.mrb[0].mxu0
        %v1100 = vadd.f32 0.0, %v1099
        %v1101 = vpop.f32.mrb[0].mxu0
        %v1102 = vadd.f32 0.0, %v1101
        %1103 = vmatprep.mubr.f32.mxu0 %v604
        %1104 = vmatmul.mubr.f32.gmra.mrb[0].mxu0 %v603
        %v1105 = vpop.f32.mrb[0].mxu0
        %v1106 = vadd.f32 0.0, %v1105
        %v1107 = vpop.f32.mrb[0].mxu0
        %v1108 = vadd.f32 0.0, %v1107
        %1109 = vmatprep.mubr.f32.mxu0 %v608
        %1110 = vmatmul.mubr.f32.gmra.mrb[0].mxu0 %v607
        %v1111 = vpop.f32.mrb[0].mxu0
        %v1112 = vadd.f32 0.0, %v1111
        %v1113 = vpop.f32.mrb[0].mxu0
        %v1114 = vadd.f32 0.0, %v1113
        %1115 = vmatprep.mubr.f32.mxu0 %v612
        %1116 = vmatmul.mubr.f32.gmra.mrb[0].mxu0 %v611
        %v1117 = vpop.f32.mrb[0].mxu0
        %v1118 = vadd.f32 0.0, %v1117
        %v1119 = vpop.f32.mrb[0].mxu0
        %v1120 = vadd.f32 0.0, %v1119
        %1121 = vmatprep.mubr.f32.mxu0 %v616
        %1122 = vmatmul.mubr.f32.gmra.mrb[0].mxu0 %v615
        %v1123 = vpop.f32.mrb[0].mxu0
        %v1124 = vadd.f32 0.0, %v1123
        %v1125 = vpop.f32.mrb[0].mxu0
        %v1126 = vadd.f32 0.0, %v1125
        %1127 = vmatprep.mubr.f32.mxu0 %v620
        %1128 = vmatmul.mubr.f32.gmra.mrb[0].mxu0 %v619
        %v1129 = vpop.f32.mrb[0].mxu0
        %v1130 = vadd.f32 0.0, %v1129
        %v1131 = vpop.f32.mrb[0].mxu0
        %v1132 = vadd.f32 0.0, %v1131
        %1133 = vmatprep.mubr.f32.mxu0 %v624
        %1134 = vmatmul.mubr.f32.gmra.mrb[0].mxu0 %v623
        %v1135 = vpop.f32.mrb[0].mxu0
        %v1136 = vadd.f32 0.0, %v1135
        %v1137 = vpop.f32.mrb[0].mxu0
        %v1138 = vadd.f32 0.0, %v1137
        %1139 = vdwg.mxu0
        %1140 = vmatprep.subr.mxu0 %v756
        %1141 = vmatpush1.msra.mxu0 %v755
        %1142 = vmatprep.subr.mxu0 %v760
        %1143 = vmatpush1.msra.mxu0 %v759
        %1144 = vmatprep.subr.mxu0 %v764
        %1145 = vmatpush1.msra.mxu0 %v763
        %1146 = vmatprep.subr.mxu0 %v768
        %1147 = vmatpush1.msra.mxu0 %v767
        %1148 = vmatprep.subr.mxu0 %v772
        %1149 = vmatpush1.msra.mxu0 %v771
        %1150 = vmatprep.subr.mxu0 %v776
        %1151 = vmatpush1.msra.mxu0 %v775
        %1152 = vmatprep.subr.mxu0 %v780
        %1153 = vmatpush1.msra.mxu0 %v779
        %1154 = vmatprep.subr.mxu0 %v784
        %1155 = vmatpush1.msra.mxu0 %v783
        %1156 = vmatprep.subr.mxu0 %v788
        %1157 = vmatpush1.msra.mxu0 %v787
        %1158 = vmatprep.subr.mxu0 %v792
        %1159 = vmatpush1.msra.mxu0 %v791
        %1160 = vmatprep.subr.mxu0 %v796
        %1161 = vmatpush1.msra.mxu0 %v795
        %1162 = vmatprep.subr.mxu0 %v800
        %1163 = vmatpush1.msra.mxu0 %v799
        %1164 = vmatprep.subr.mxu0 %v804
        %1165 = vmatpush1.msra.mxu0 %v803
        %1166 = vmatprep.subr.mxu0 %v808
        %1167 = vmatpush1.msra.mxu0 %v807
        %1168 = vmatprep.subr.mxu0 %v812
        %1169 = vmatpush1.msra.mxu0 %v811
        %1170 = vmatprep.subr.mxu0 %v816
        %1171 = vmatpush1.msra.mxu0 %v815
        %1172 = vmatprep.subr.mxu0 %v820
        %1173 = vmatpush1.msra.mxu0 %v819
        %1174 = vmatprep.subr.mxu0 %v824
        %1175 = vmatpush1.msra.mxu0 %v823
        %1176 = vmatprep.subr.mxu0 %v828
        %1177 = vmatpush1.msra.mxu0 %v827
        %1178 = vmatprep.subr.mxu0 %v832
        %1179 = vmatpush1.msra.mxu0 %v831
        %1180 = vmatprep.subr.mxu0 %v836
        %1181 = vmatpush1.msra.mxu0 %v835
        %1182 = vmatprep.subr.mxu0 %v840
        %1183 = vmatpush1.msra.mxu0 %v839
        %1184 = vmatprep.subr.mxu0 %v844
        %1185 = vmatpush1.msra.mxu0 %v843
        %1186 = vmatprep.subr.mxu0 %v848
        %1187 = vmatpush1.msra.mxu0 %v847
        %1188 = vmatprep.subr.mxu0 %v852
        %1189 = vmatpush1.msra.mxu0 %v851
        %1190 = vmatprep.subr.mxu0 %v856
        %1191 = vmatpush1.msra.mxu0 %v855
        %1192 = vmatprep.subr.mxu0 %v860
        %1193 = vmatpush1.msra.mxu0 %v859
        %1194 = vmatprep.subr.mxu0 %v864
        %1195 = vmatpush1.msra.mxu0 %v863
        %1196 = vmatprep.subr.mxu0 %v868
        %1197 = vmatpush1.msra.mxu0 %v867
        %1198 = vmatprep.subr.mxu0 %v872
        %1199 = vmatpush1.msra.mxu0 %v871
        %1200 = vmatprep.subr.mxu0 %v876
        %1201 = vmatpush1.msra.mxu0 %v875
        %1202 = vmatprep.subr.mxu0 %v880
        %1203 = vmatpush1.msra.mxu0 %v879
        %1204 = vmatprep.mubr.f32.mxu0 %v502
        %1205 = vmatmul.mubr.f32.gmra.mrb[0].mxu0 %v501
        %v1206 = vpop.f32.mrb[0].mxu0
        %v1207 = vadd.f32 %v950, %v1206
        %v1208 = vpop.f32.mrb[0].mxu0
        %v1209 = vadd.f32 %v952, %v1208
        %1210 = vmatprep.mubr.f32.mxu0 %v506
        %1211 = vmatmul.mubr.f32.gmra.mrb[0].mxu0 %v505
        %v1212 = vpop.f32.mrb[0].mxu0
        %v1213 = vadd.f32 %v956, %v1212
        %v1214 = vpop.f32.mrb[0].mxu0
        %v1215 = vadd.f32 %v958, %v1214
        %1216 = vmatprep.mubr.f32.mxu0 %v510
        %1217 = vmatmul.mubr.f32.gmra.mrb[0].mxu0 %v509
        %v1218 = vpop.f32.mrb[0].mxu0
        %v1219 = vadd.f32 %v962, %v1218
        %v1220 = vpop.f32.mrb[0].mxu0
        %v1221 = vadd.f32 %v964, %v1220
        %1222 = vmatprep.mubr.f32.mxu0 %v514
        %1223 = vmatmul.mubr.f32.gmra.mrb[0].mxu0 %v513
        %v1224 = vpop.f32.mrb[0].mxu0
        %v1225 = vadd.f32 %v968, %v1224
        %v1226 = vpop.f32.mrb[0].mxu0
        %v1227 = vadd.f32 %v970, %v1226
        %1228 = vmatprep.mubr.f32.mxu0 %v518
        %1229 = vmatmul.mubr.f32.gmra.mrb[0].mxu0 %v517
        %v1230 = vpop.f32.mrb[0].mxu0
        %v1231 = vadd.f32 %v974, %v1230
        %v1232 = vpop.f32.mrb[0].mxu0
        %v1233 = vadd.f32 %v976, %v1232
        %1234 = vmatprep.mubr.f32.mxu0 %v522
        %1235 = vmatmul.mubr.f32.gmra.mrb[0].mxu0 %v521
        %v1236 = vpop.f32.mrb[0].mxu0
        %v1237 = vadd.f32 %v980, %v1236
        %v1238 = vpop.f32.mrb[0].mxu0
        %v1239 = vadd.f32 %v982, %v1238
        %1240 = vmatprep.mubr.f32.mxu0 %v526
        %1241 = vmatmul.mubr.f32.gmra.mrb[0].mxu0 %v525
        %v1242 = vpop.f32.mrb[0].mxu0
        %v1243 = vadd.f32 %v986, %v1242
        %v1244 = vpop.f32.mrb[0].mxu0
        %v1245 = vadd.f32 %v988, %v1244
        %1246 = vmatprep.mubr.f32.mxu0 %v530
        %1247 = vmatmul.mubr.f32.gmra.mrb[0].mxu0 %v529
        %v1248 = vpop.f32.mrb[0].mxu0
        %v1249 = vadd.f32 %v992, %v1248
        %v1250 = vpop.f32.mrb[0].mxu0
        %v1251 = vadd.f32 %v994, %v1250
        %1252 = vmatprep.mubr.f32.mxu0 %v534
        %1253 = vmatmul.mubr.f32.gmra.mrb[0].mxu0 %v533
        %v1254 = vpop.f32.mrb[0].mxu0
        %v1255 = vadd.f32 %v998, %v1254
        %v1256 = vpop.f32.mrb[0].mxu0
        %v1257 = vadd.f32 %v1000, %v1256
        %1258 = vmatprep.mubr.f32.mxu0 %v538
        %1259 = vmatmul.mubr.f32.gmra.mrb[0].mxu0 %v537
        %v1260 = vpop.f32.mrb[0].mxu0
        %v1261 = vadd.f32 %v1004, %v1260
        %v1262 = vpop.f32.mrb[0].mxu0
        %v1263 = vadd.f32 %v1006, %v1262
        %1264 = vmatprep.mubr.f32.mxu0 %v542
        %1265 = vmatmul.mubr.f32.gmra.mrb[0].mxu0 %v541
        %v1266 = vpop.f32.mrb[0].mxu0
        %v1267 = vadd.f32 %v1010, %v1266
        %v1268 = vpop.f32.mrb[0].mxu0
        %v1269 = vadd.f32 %v1012, %v1268
        %1270 = vmatprep.mubr.f32.mxu0 %v546
        %1271 = vmatmul.mubr.f32.gmra.mrb[0].mxu0 %v545
        %v1272 = vpop.f32.mrb[0].mxu0
        %v1273 = vadd.f32 %v1016, %v1272
        %v1274 = vpop.f32.mrb[0].mxu0
        %v1275 = vadd.f32 %v1018, %v1274
        %1276 = vmatprep.mubr.f32.mxu0 %v550
        %1277 = vmatmul.mubr.f32.gmra.mrb[0].mxu0 %v549
        %v1278 = vpop.f32.mrb[0].mxu0
        %v1279 = vadd.f32 %v1022, %v1278
        %v1280 = vpop.f32.mrb[0].mxu0
        %v1281 = vadd.f32 %v1024, %v1280
        %1282 = vmatprep.mubr.f32.mxu0 %v554
        %1283 = vmatmul.mubr.f32.gmra.mrb[0].mxu0 %v553
        %v1284 = vpop.f32.mrb[0].mxu0
        %v1285 = vadd.f32 %v1028, %v1284
        %v1286 = vpop.f32.mrb[0].mxu0
        %v1287 = vadd.f32 %v1030, %v1286
        %1288 = vmatprep.mubr.f32.mxu0 %v558
        %1289 = vmatmul.mubr.f32.gmra.mrb[0].mxu0 %v557
        %v1290 = vpop.f32.mrb[0].mxu0
        %v1291 = vadd.f32 %v1034, %v1290
        %v1292 = vpop.f32.mrb[0].mxu0
        %v1293 = vadd.f32 %v1036, %v1292
        %1294 = vmatprep.mubr.f32.mxu0 %v562
        %1295 = vmatmul.mubr.f32.gmra.mrb[0].mxu0 %v561
        %v1296 = vpop.f32.mrb[0].mxu0
        %v1297 = vadd.f32 %v1040, %v1296
        %v1298 = vpop.f32.mrb[0].mxu0
        %v1299 = vadd.f32 %v1042, %v1298
        %1300 = vmatprep.mubr.f32.mxu0 %v566
        %1301 = vmatmul.mubr.f32.gmra.mrb[0].mxu0 %v565
        %v1302 = vpop.f32.mrb[0].mxu0
        %v1303 = vadd.f32 %v1046, %v1302
        %v1304 = vpop.f32.mrb[0].mxu0
        %v1305 = vadd.f32 %v1048, %v1304
        %1306 = vmatprep.mubr.f32.mxu0 %v570
        %1307 = vmatmul.mubr.f32.gmra.mrb[0].mxu0 %v569
        %v1308 = vpop.f32.mrb[0].mxu0
        %v1309 = vadd.f32 %v1052, %v1308
        %v1310 = vpop.f32.mrb[0].mxu0
        %v1311 = vadd.f32 %v1054, %v1310
        %1312 = vmatprep.mubr.f32.mxu0 %v574
        %1313 = vmatmul.mubr.f32.gmra.mrb[0].mxu0 %v573
        %v1314 = vpop.f32.mrb[0].mxu0
        %v1315 = vadd.f32 %v1058, %v1314
        %v1316 = vpop.f32.mrb[0].mxu0
        %v1317 = vadd.f32 %v1060, %v1316
        %1318 = vmatprep.mubr.f32.mxu0 %v578
        %1319 = vmatmul.mubr.f32.gmra.mrb[0].mxu0 %v577
        %v1320 = vpop.f32.mrb[0].mxu0
        %v1321 = vadd.f32 %v1064, %v1320
        %v1322 = vpop.f32.mrb[0].mxu0
        %v1323 = vadd.f32 %v1066, %v1322
        %1324 = vmatprep.mubr.f32.mxu0 %v582
        %1325 = vmatmul.mubr.f32.gmra.mrb[0].mxu0 %v581
        %v1326 = vpop.f32.mrb[0].mxu0
        %v1327 = vadd.f32 %v1070, %v1326
        %v1328 = vpop.f32.mrb[0].mxu0
        %v1329 = vadd.f32 %v1072, %v1328
        %1330 = vmatprep.mubr.f32.mxu0 %v586
        %1331 = vmatmul.mubr.f32.gmra.mrb[0].mxu0 %v585
        %v1332 = vpop.f32.mrb[0].mxu0
        %v1333 = vadd.f32 %v1076, %v1332
        %v1334 = vpop.f32.mrb[0].mxu0
        %v1335 = vadd.f32 %v1078, %v1334
        %1336 = vmatprep.mubr.f32.mxu0 %v590
        %1337 = vmatmul.mubr.f32.gmra.mrb[0].mxu0 %v589
        %v1338 = vpop.f32.mrb[0].mxu0
        %v1339 = vadd.f32 %v1082, %v1338
        %v1340 = vpop.f32.mrb[0].mxu0
        %v1341 = vadd.f32 %v1084, %v1340
        %1342 = vmatprep.mubr.f32.mxu0 %v594
        %1343 = vmatmul.mubr.f32.gmra.mrb[0].mxu0 %v593
        %v1344 = vpop.f32.mrb[0].mxu0
        %v1345 = vadd.f32 %v1088, %v1344
        %v1346 = vpop.f32.mrb[0].mxu0
        %v1347 = vadd.f32 %v1090, %v1346
        %1348 = vmatprep.mubr.f32.mxu0 %v598
        %1349 = vmatmul.mubr.f32.gmra.mrb[0].mxu0 %v597
        %v1350 = vpop.f32.mrb[0].mxu0
        %v1351 = vadd.f32 %v1094, %v1350
        %v1352 = vpop.f32.mrb[0].mxu0
        %v1353 = vadd.f32 %v1096, %v1352
        %1354 = vmatprep.mubr.f32.mxu0 %v602
        %1355 = vmatmul.mubr.f32.gmra.mrb[0].mxu0 %v601
        %v1356 = vpop.f32.mrb[0].mxu0
        %v1357 = vadd.f32 %v1100, %v1356
        %v1358 = vpop.f32.mrb[0].mxu0
        %v1359 = vadd.f32 %v1102, %v1358
        %1360 = vmatprep.mubr.f32.mxu0 %v606
        %1361 = vmatmul.mubr.f32.gmra.mrb[0].mxu0 %v605
        %v1362 = vpop.f32.mrb[0].mxu0
        %v1363 = vadd.f32 %v1106, %v1362
        %v1364 = vpop.f32.mrb[0].mxu0
        %v1365 = vadd.f32 %v1108, %v1364
        %1366 = vmatprep.mubr.f32.mxu0 %v610
        %1367 = vmatmul.mubr.f32.gmra.mrb[0].mxu0 %v609
        %v1368 = vpop.f32.mrb[0].mxu0
        %v1369 = vadd.f32 %v1112, %v1368
        %v1370 = vpop.f32.mrb[0].mxu0
        %v1371 = vadd.f32 %v1114, %v1370
        %1372 = vmatprep.mubr.f32.mxu0 %v614
        %1373 = vmatmul.mubr.f32.gmra.mrb[0].mxu0 %v613
        %v1374 = vpop.f32.mrb[0].mxu0
        %v1375 = vadd.f32 %v1118, %v1374
        %v1376 = vpop.f32.mrb[0].mxu0
        %v1377 = vadd.f32 %v1120, %v1376
        %1378 = vmatprep.mubr.f32.mxu0 %v618
        %1379 = vmatmul.mubr.f32.gmra.mrb[0].mxu0 %v617
        %v1380 = vpop.f32.mrb[0].mxu0
        %v1381 = vadd.f32 %v1124, %v1380
        %v1382 = vpop.f32.mrb[0].mxu0
        %v1383 = vadd.f32 %v1126, %v1382
        %1384 = vmatprep.mubr.f32.mxu0 %v622
        %1385 = vmatmul.mubr.f32.gmra.mrb[0].mxu0 %v621
        %v1386 = vpop.f32.mrb[0].mxu0
        %v1387 = vadd.f32 %v1130, %v1386
        %v1388 = vpop.f32.mrb[0].mxu0
        %v1389 = vadd.f32 %v1132, %v1388
        %1390 = vmatprep.mubr.f32.mxu0 %v626
        %1391 = vmatmul.mubr.f32.gmra.mrb[0].mxu0 %v625
        %v1392 = vpop.f32.mrb[0].mxu0
        %v1393 = vadd.f32 %v1136, %v1392
        %v1394 = vpop.f32.mrb[0].mxu0
        %v1395 = vadd.f32 %v1138, %v1394
        %1396 = vdwg.mxu0
        %1397 = vmatprep.subr.mxu0 %v630
        %1398 = vmatpush1.msra.mxu0 %v629
        %1399 = vmatprep.subr.mxu0 %v634
        %1400 = vmatpush1.msra.mxu0 %v633
        %1401 = vmatprep.subr.mxu0 %v638
        %1402 = vmatpush1.msra.mxu0 %v637
        %1403 = vmatprep.subr.mxu0 %v642
        %1404 = vmatpush1.msra.mxu0 %v641
        %1405 = vmatprep.subr.mxu0 %v646
        %1406 = vmatpush1.msra.mxu0 %v645
        %1407 = vmatprep.subr.mxu0 %v650
        %1408 = vmatpush1.msra.mxu0 %v649
        %1409 = vmatprep.subr.mxu0 %v654
        %1410 = vmatpush1.msra.mxu0 %v653
        %1411 = vmatprep.subr.mxu0 %v658
        %1412 = vmatpush1.msra.mxu0 %v657
        %1413 = vmatprep.subr.mxu0 %v662
        %1414 = vmatpush1.msra.mxu0 %v661
        %1415 = vmatprep.subr.mxu0 %v666
        %1416 = vmatpush1.msra.mxu0 %v665
        %1417 = vmatprep.subr.mxu0 %v670
        %1418 = vmatpush1.msra.mxu0 %v669
        %1419 = vmatprep.subr.mxu0 %v674
        %1420 = vmatpush1.msra.mxu0 %v673
        %1421 = vmatprep.subr.mxu0 %v678
        %1422 = vmatpush1.msra.mxu0 %v677
        %1423 = vmatprep.subr.mxu0 %v682
        %1424 = vmatpush1.msra.mxu0 %v681
        %1425 = vmatprep.subr.mxu0 %v686
        %1426 = vmatpush1.msra.mxu0 %v685
        %1427 = vmatprep.subr.mxu0 %v690
        %1428 = vmatpush1.msra.mxu0 %v689
        %1429 = vmatprep.subr.mxu0 %v694
        %1430 = vmatpush1.msra.mxu0 %v693
        %1431 = vmatprep.subr.mxu0 %v698
        %1432 = vmatpush1.msra.mxu0 %v697
        %1433 = vmatprep.subr.mxu0 %v702
        %1434 = vmatpush1.msra.mxu0 %v701
        %1435 = vmatprep.subr.mxu0 %v706
        %1436 = vmatpush1.msra.mxu0 %v705
        %1437 = vmatprep.subr.mxu0 %v710
        %1438 = vmatpush1.msra.mxu0 %v709
        %1439 = vmatprep.subr.mxu0 %v714
        %1440 = vmatpush1.msra.mxu0 %v713
        %1441 = vmatprep.subr.mxu0 %v718
        %1442 = vmatpush1.msra.mxu0 %v717
        %1443 = vmatprep.subr.mxu0 %v722
        %1444 = vmatpush1.msra.mxu0 %v721
        %1445 = vmatprep.subr.mxu0 %v726
        %1446 = vmatpush1.msra.mxu0 %v725
        %1447 = vmatprep.subr.mxu0 %v730
        %1448 = vmatpush1.msra.mxu0 %v729
        %1449 = vmatprep.subr.mxu0 %v734
        %1450 = vmatpush1.msra.mxu0 %v733
        %1451 = vmatprep.subr.mxu0 %v738
        %1452 = vmatpush1.msra.mxu0 %v737
        %1453 = vmatprep.subr.mxu0 %v742
        %1454 = vmatpush1.msra.mxu0 %v741
        %1455 = vmatprep.subr.mxu0 %v746
        %1456 = vmatpush1.msra.mxu0 %v745
        %1457 = vmatprep.subr.mxu0 %v750
        %1458 = vmatpush1.msra.mxu0 %v749
        %1459 = vmatprep.subr.mxu0 %v754
        %1460 = vmatpush1.msra.mxu0 %v753
        %1461 = vmatprep.mubr.f32.mxu0 %v500
        %1462 = vmatmul.mubr.f32.gmra.mrb[0].mxu0 %v499
        %v1463 = vpop.f32.mrb[0].mxu0
        %v1464 = vadd.f32 0.0, %v1463
        %v1465 = vpop.f32.mrb[0].mxu0
        %v1466 = vadd.f32 0.0, %v1465
        %1467 = vmatprep.mubr.f32.mxu0 %v504
        %1468 = vmatmul.mubr.f32.gmra.mrb[0].mxu0 %v503
        %v1469 = vpop.f32.mrb[0].mxu0
        %v1470 = vadd.f32 0.0, %v1469
        %v1471 = vpop.f32.mrb[0].mxu0
        %v1472 = vadd.f32 0.0, %v1471
        %1473 = vmatprep.mubr.f32.mxu0 %v508
        %1474 = vmatmul.mubr.f32.gmra.mrb[0].mxu0 %v507
        %v1475 = vpop.f32.mrb[0].mxu0
        %v1476 = vadd.f32 0.0, %v1475
        %v1477 = vpop.f32.mrb[0].mxu0
        %v1478 = vadd.f32 0.0, %v1477
        %1479 = vmatprep.mubr.f32.mxu0 %v512
        %1480 = vmatmul.mubr.f32.gmra.mrb[0].mxu0 %v511
        %v1481 = vpop.f32.mrb[0].mxu0
        %v1482 = vadd.f32 0.0, %v1481
        %v1483 = vpop.f32.mrb[0].mxu0
        %v1484 = vadd.f32 0.0, %v1483
        %1485 = vmatprep.mubr.f32.mxu0 %v516
        %1486 = vmatmul.mubr.f32.gmra.mrb[0].mxu0 %v515
        %v1487 = vpop.f32.mrb[0].mxu0
        %v1488 = vadd.f32 0.0, %v1487
        %v1489 = vpop.f32.mrb[0].mxu0
        %v1490 = vadd.f32 0.0, %v1489
        %1491 = vmatprep.mubr.f32.mxu0 %v520
        %1492 = vmatmul.mubr.f32.gmra.mrb[0].mxu0 %v519
        %v1493 = vpop.f32.mrb[0].mxu0
        %v1494 = vadd.f32 0.0, %v1493
        %v1495 = vpop.f32.mrb[0].mxu0
        %v1496 = vadd.f32 0.0, %v1495
        %1497 = vmatprep.mubr.f32.mxu0 %v524
        %1498 = vmatmul.mubr.f32.gmra.mrb[0].mxu0 %v523
        %v1499 = vpop.f32.mrb[0].mxu0
        %v1500 = vadd.f32 0.0, %v1499
        %v1501 = vpop.f32.mrb[0].mxu0
        %v1502 = vadd.f32 0.0, %v1501
        %1503 = vmatprep.mubr.f32.mxu0 %v528
        %1504 = vmatmul.mubr.f32.gmra.mrb[0].mxu0 %v527
        %v1505 = vpop.f32.mrb[0].mxu0
        %v1506 = vadd.f32 0.0, %v1505
        %v1507 = vpop.f32.mrb[0].mxu0
        %v1508 = vadd.f32 0.0, %v1507
        %1509 = vmatprep.mubr.f32.mxu0 %v532
        %1510 = vmatmul.mubr.f32.gmra.mrb[0].mxu0 %v531
        %v1511 = vpop.f32.mrb[0].mxu0
        %v1512 = vadd.f32 0.0, %v1511
        %v1513 = vpop.f32.mrb[0].mxu0
        %v1514 = vadd.f32 0.0, %v1513
        %1515 = vmatprep.mubr.f32.mxu0 %v536
        %1516 = vmatmul.mubr.f32.gmra.mrb[0].mxu0 %v535
        %v1517 = vpop.f32.mrb[0].mxu0
        %v1518 = vadd.f32 0.0, %v1517
        %v1519 = vpop.f32.mrb[0].mxu0
        %v1520 = vadd.f32 0.0, %v1519
        %1521 = vmatprep.mubr.f32.mxu0 %v540
        %1522 = vmatmul.mubr.f32.gmra.mrb[0].mxu0 %v539
        %v1523 = vpop.f32.mrb[0].mxu0
        %v1524 = vadd.f32 0.0, %v1523
        %v1525 = vpop.f32.mrb[0].mxu0
        %v1526 = vadd.f32 0.0, %v1525
        %1527 = vmatprep.mubr.f32.mxu0 %v544
        %1528 = vmatmul.mubr.f32.gmra.mrb[0].mxu0 %v543
        %v1529 = vpop.f32.mrb[0].mxu0
        %v1530 = vadd.f32 0.0, %v1529
        %v1531 = vpop.f32.mrb[0].mxu0
        %v1532 = vadd.f32 0.0, %v1531
        %1533 = vmatprep.mubr.f32.mxu0 %v548
        %1534 = vmatmul.mubr.f32.gmra.mrb[0].mxu0 %v547
        %v1535 = vpop.f32.mrb[0].mxu0
        %v1536 = vadd.f32 0.0, %v1535
        %v1537 = vpop.f32.mrb[0].mxu0
        %v1538 = vadd.f32 0.0, %v1537
        %1539 = vmatprep.mubr.f32.mxu0 %v552
        %1540 = vmatmul.mubr.f32.gmra.mrb[0].mxu0 %v551
        %v1541 = vpop.f32.mrb[0].mxu0
        %v1542 = vadd.f32 0.0, %v1541
        %v1543 = vpop.f32.mrb[0].mxu0
        %v1544 = vadd.f32 0.0, %v1543
        %1545 = vmatprep.mubr.f32.mxu0 %v556
        %1546 = vmatmul.mubr.f32.gmra.mrb[0].mxu0 %v555
        %v1547 = vpop.f32.mrb[0].mxu0
        %v1548 = vadd.f32 0.0, %v1547
        %v1549 = vpop.f32.mrb[0].mxu0
        %v1550 = vadd.f32 0.0, %v1549
        %1551 = vmatprep.mubr.f32.mxu0 %v560
        %1552 = vmatmul.mubr.f32.gmra.mrb[0].mxu0 %v559
        %v1553 = vpop.f32.mrb[0].mxu0
        %v1554 = vadd.f32 0.0, %v1553
        %v1555 = vpop.f32.mrb[0].mxu0
        %v1556 = vadd.f32 0.0, %v1555
        %1557 = vmatprep.mubr.f32.mxu0 %v564
        %1558 = vmatmul.mubr.f32.gmra.mrb[0].mxu0 %v563
        %v1559 = vpop.f32.mrb[0].mxu0
        %v1560 = vadd.f32 0.0, %v1559
        %v1561 = vpop.f32.mrb[0].mxu0
        %v1562 = vadd.f32 0.0, %v1561
        %1563 = vmatprep.mubr.f32.mxu0 %v568
        %1564 = vmatmul.mubr.f32.gmra.mrb[0].mxu0 %v567
        %v1565 = vpop.f32.mrb[0].mxu0
        %v1566 = vadd.f32 0.0, %v1565
        %v1567 = vpop.f32.mrb[0].mxu0
        %v1568 = vadd.f32 0.0, %v1567
        %1569 = vmatprep.mubr.f32.mxu0 %v572
        %1570 = vmatmul.mubr.f32.gmra.mrb[0].mxu0 %v571
        %v1571 = vpop.f32.mrb[0].mxu0
        %v1572 = vadd.f32 0.0, %v1571
        %v1573 = vpop.f32.mrb[0].mxu0
        %v1574 = vadd.f32 0.0, %v1573
        %1575 = vmatprep.mubr.f32.mxu0 %v576
        %1576 = vmatmul.mubr.f32.gmra.mrb[0].mxu0 %v575
        %v1577 = vpop.f32.mrb[0].mxu0
        %v1578 = vadd.f32 0.0, %v1577
        %v1579 = vpop.f32.mrb[0].mxu0
        %v1580 = vadd.f32 0.0, %v1579
        %1581 = vmatprep.mubr.f32.mxu0 %v580
        %1582 = vmatmul.mubr.f32.gmra.mrb[0].mxu0 %v579
        %v1583 = vpop.f32.mrb[0].mxu0
        %v1584 = vadd.f32 0.0, %v1583
        %v1585 = vpop.f32.mrb[0].mxu0
        %v1586 = vadd.f32 0.0, %v1585
        %1587 = vmatprep.mubr.f32.mxu0 %v584
        %1588 = vmatmul.mubr.f32.gmra.mrb[0].mxu0 %v583
        %v1589 = vpop.f32.mrb[0].mxu0
        %v1590 = vadd.f32 0.0, %v1589
        %v1591 = vpop.f32.mrb[0].mxu0
        %v1592 = vadd.f32 0.0, %v1591
        %1593 = vmatprep.mubr.f32.mxu0 %v588
        %1594 = vmatmul.mubr.f32.gmra.mrb[0].mxu0 %v587
        %v1595 = vpop.f32.mrb[0].mxu0
        %v1596 = vadd.f32 0.0, %v1595
        %v1597 = vpop.f32.mrb[0].mxu0
        %v1598 = vadd.f32 0.0, %v1597
        %1599 = vmatprep.mubr.f32.mxu0 %v592
        %1600 = vmatmul.mubr.f32.gmra.mrb[0].mxu0 %v591
        %v1601 = vpop.f32.mrb[0].mxu0
        %v1602 = vadd.f32 0.0, %v1601
        %v1603 = vpop.f32.mrb[0].mxu0
        %v1604 = vadd.f32 0.0, %v1603
        %1605 = vmatprep.mubr.f32.mxu0 %v596
        %1606 = vmatmul.mubr.f32.gmra.mrb[0].mxu0 %v595
        %v1607 = vpop.f32.mrb[0].mxu0
        %v1608 = vadd.f32 0.0, %v1607
        %v1609 = vpop.f32.mrb[0].mxu0
        %v1610 = vadd.f32 0.0, %v1609
        %1611 = vmatprep.mubr.f32.mxu0 %v600
        %1612 = vmatmul.mubr.f32.gmra.mrb[0].mxu0 %v599
        %v1613 = vpop.f32.mrb[0].mxu0
        %v1614 = vadd.f32 0.0, %v1613
        %v1615 = vpop.f32.mrb[0].mxu0
        %v1616 = vadd.f32 0.0, %v1615
        %1617 = vmatprep.mubr.f32.mxu0 %v604
        %1618 = vmatmul.mubr.f32.gmra.mrb[0].mxu0 %v603
        %v1619 = vpop.f32.mrb[0].mxu0
        %v1620 = vadd.f32 0.0, %v1619
        %v1621 = vpop.f32.mrb[0].mxu0
        %v1622 = vadd.f32 0.0, %v1621
        %1623 = vmatprep.mubr.f32.mxu0 %v608
        %1624 = vmatmul.mubr.f32.gmra.mrb[0].mxu0 %v607
        %v1625 = vpop.f32.mrb[0].mxu0
        %v1626 = vadd.f32 0.0, %v1625
        %v1627 = vpop.f32.mrb[0].mxu0
        %v1628 = vadd.f32 0.0, %v1627
        %1629 = vmatprep.mubr.f32.mxu0 %v612
        %1630 = vmatmul.mubr.f32.gmra.mrb[0].mxu0 %v611
        %v1631 = vpop.f32.mrb[0].mxu0
        %v1632 = vadd.f32 0.0, %v1631
        %v1633 = vpop.f32.mrb[0].mxu0
        %v1634 = vadd.f32 0.0, %v1633
        %1635 = vmatprep.mubr.f32.mxu0 %v616
        %1636 = vmatmul.mubr.f32.gmra.mrb[0].mxu0 %v615
        %v1637 = vpop.f32.mrb[0].mxu0
        %v1638 = vadd.f32 0.0, %v1637
        %v1639 = vpop.f32.mrb[0].mxu0
        %v1640 = vadd.f32 0.0, %v1639
        %1641 = vmatprep.mubr.f32.mxu0 %v620
        %1642 = vmatmul.mubr.f32.gmra.mrb[0].mxu0 %v619
        %v1643 = vpop.f32.mrb[0].mxu0
        %v1644 = vadd.f32 0.0, %v1643
        %v1645 = vpop.f32.mrb[0].mxu0
        %v1646 = vadd.f32 0.0, %v1645
        %1647 = vmatprep.mubr.f32.mxu0 %v624
        %1648 = vmatmul.mubr.f32.gmra.mrb[0].mxu0 %v623
        %v1649 = vpop.f32.mrb[0].mxu0
        %v1650 = vadd.f32 0.0, %v1649
        %v1651 = vpop.f32.mrb[0].mxu0
        %v1652 = vadd.f32 0.0, %v1651
        %1653 = vdwg.mxu0
        %1654 = vmatprep.subr.mxu0 %v758
        %1655 = vmatpush1.msra.mxu0 %v757
        %1656 = vmatprep.subr.mxu0 %v762
        %1657 = vmatpush1.msra.mxu0 %v761
        %1658 = vmatprep.subr.mxu0 %v766
        %1659 = vmatpush1.msra.mxu0 %v765
        %1660 = vmatprep.subr.mxu0 %v770
        %1661 = vmatpush1.msra.mxu0 %v769
        %1662 = vmatprep.subr.mxu0 %v774
        %1663 = vmatpush1.msra.mxu0 %v773
        %1664 = vmatprep.subr.mxu0 %v778
        %1665 = vmatpush1.msra.mxu0 %v777
        %1666 = vmatprep.subr.mxu0 %v782
        %1667 = vmatpush1.msra.mxu0 %v781
        %1668 = vmatprep.subr.mxu0 %v786
        %1669 = vmatpush1.msra.mxu0 %v785
        %1670 = vmatprep.subr.mxu0 %v790
        %1671 = vmatpush1.msra.mxu0 %v789
        %1672 = vmatprep.subr.mxu0 %v794
        %1673 = vmatpush1.msra.mxu0 %v793
        %1674 = vmatprep.subr.mxu0 %v798
        %1675 = vmatpush1.msra.mxu0 %v797
        %1676 = vmatprep.subr.mxu0 %v802
        %1677 = vmatpush1.msra.mxu0 %v801
        %1678 = vmatprep.subr.mxu0 %v806
        %1679 = vmatpush1.msra.mxu0 %v805
        %1680 = vmatprep.subr.mxu0 %v810
        %1681 = vmatpush1.msra.mxu0 %v809
        %1682 = vmatprep.subr.mxu0 %v814
        %1683 = vmatpush1.msra.mxu0 %v813
        %1684 = vmatprep.subr.mxu0 %v818
        %1685 = vmatpush1.msra.mxu0 %v817
        %1686 = vmatprep.subr.mxu0 %v822
        %1687 = vmatpush1.msra.mxu0 %v821
        %1688 = vmatprep.subr.mxu0 %v826
        %1689 = vmatpush1.msra.mxu0 %v825
        %1690 = vmatprep.subr.mxu0 %v830
        %1691 = vmatpush1.msra.mxu0 %v829
        %1692 = vmatprep.subr.mxu0 %v834
        %1693 = vmatpush1.msra.mxu0 %v833
        %1694 = vmatprep.subr.mxu0 %v838
        %1695 = vmatpush1.msra.mxu0 %v837
        %1696 = vmatprep.subr.mxu0 %v842
        %1697 = vmatpush1.msra.mxu0 %v841
        %1698 = vmatprep.subr.mxu0 %v846
        %1699 = vmatpush1.msra.mxu0 %v845
        %1700 = vmatprep.subr.mxu0 %v850
        %1701 = vmatpush1.msra.mxu0 %v849
        %1702 = vmatprep.subr.mxu0 %v854
        %1703 = vmatpush1.msra.mxu0 %v853
        %1704 = vmatprep.subr.mxu0 %v858
        %1705 = vmatpush1.msra.mxu0 %v857
        %1706 = vmatprep.subr.mxu0 %v862
        %1707 = vmatpush1.msra.mxu0 %v861
        %1708 = vmatprep.subr.mxu0 %v866
        %1709 = vmatpush1.msra.mxu0 %v865
        %1710 = vmatprep.subr.mxu0 %v870
        %1711 = vmatpush1.msra.mxu0 %v869
        %1712 = vmatprep.subr.mxu0 %v874
        %1713 = vmatpush1.msra.mxu0 %v873
        %1714 = vmatprep.subr.mxu0 %v878
        %1715 = vmatpush1.msra.mxu0 %v877
        %1716 = vmatprep.subr.mxu0 %v882
        %1717 = vmatpush1.msra.mxu0 %v881
        %1718 = vmatprep.mubr.f32.mxu0 %v502
        %1719 = vmatmul.mubr.f32.gmra.mrb[0].mxu0 %v501
        %v1720 = vpop.f32.mrb[0].mxu0
        %v1721 = vadd.f32 %v1464, %v1720
        %v1722 = vpop.f32.mrb[0].mxu0
        %v1723 = vadd.f32 %v1466, %v1722
        %1724 = vmatprep.mubr.f32.mxu0 %v506
        %1725 = vmatmul.mubr.f32.gmra.mrb[0].mxu0 %v505
        %v1726 = vpop.f32.mrb[0].mxu0
        %v1727 = vadd.f32 %v1470, %v1726
        %v1728 = vpop.f32.mrb[0].mxu0
        %v1729 = vadd.f32 %v1472, %v1728
        %1730 = vmatprep.mubr.f32.mxu0 %v510
        %1731 = vmatmul.mubr.f32.gmra.mrb[0].mxu0 %v509
        %v1732 = vpop.f32.mrb[0].mxu0
        %v1733 = vadd.f32 %v1476, %v1732
        %v1734 = vpop.f32.mrb[0].mxu0
        %v1735 = vadd.f32 %v1478, %v1734
        %1736 = vmatprep.mubr.f32.mxu0 %v514
        %1737 = vmatmul.mubr.f32.gmra.mrb[0].mxu0 %v513
        %v1738 = vpop.f32.mrb[0].mxu0
        %v1739 = vadd.f32 %v1482, %v1738
        %v1740 = vpop.f32.mrb[0].mxu0
        %v1741 = vadd.f32 %v1484, %v1740
        %1742 = vmatprep.mubr.f32.mxu0 %v518
        %1743 = vmatmul.mubr.f32.gmra.mrb[0].mxu0 %v517
        %v1744 = vpop.f32.mrb[0].mxu0
        %v1745 = vadd.f32 %v1488, %v1744
        %v1746 = vpop.f32.mrb[0].mxu0
        %v1747 = vadd.f32 %v1490, %v1746
        %1748 = vmatprep.mubr.f32.mxu0 %v522
        %1749 = vmatmul.mubr.f32.gmra.mrb[0].mxu0 %v521
        %v1750 = vpop.f32.mrb[0].mxu0
        %v1751 = vadd.f32 %v1494, %v1750
        %v1752 = vpop.f32.mrb[0].mxu0
        %v1753 = vadd.f32 %v1496, %v1752
        %1754 = vmatprep.mubr.f32.mxu0 %v526
        %1755 = vmatmul.mubr.f32.gmra.mrb[0].mxu0 %v525
        %v1756 = vpop.f32.mrb[0].mxu0
        %v1757 = vadd.f32 %v1500, %v1756
        %v1758 = vpop.f32.mrb[0].mxu0
        %v1759 = vadd.f32 %v1502, %v1758
        %1760 = vmatprep.mubr.f32.mxu0 %v530
        %1761 = vmatmul.mubr.f32.gmra.mrb[0].mxu0 %v529
        %v1762 = vpop.f32.mrb[0].mxu0
        %v1763 = vadd.f32 %v1506, %v1762
        %v1764 = vpop.f32.mrb[0].mxu0
        %v1765 = vadd.f32 %v1508, %v1764
        %1766 = vmatprep.mubr.f32.mxu0 %v534
        %1767 = vmatmul.mubr.f32.gmra.mrb[0].mxu0 %v533
        %v1768 = vpop.f32.mrb[0].mxu0
        %v1769 = vadd.f32 %v1512, %v1768
        %v1770 = vpop.f32.mrb[0].mxu0
        %v1771 = vadd.f32 %v1514, %v1770
        %1772 = vmatprep.mubr.f32.mxu0 %v538
        %1773 = vmatmul.mubr.f32.gmra.mrb[0].mxu0 %v537
        %v1774 = vpop.f32.mrb[0].mxu0
        %v1775 = vadd.f32 %v1518, %v1774
        %v1776 = vpop.f32.mrb[0].mxu0
        %v1777 = vadd.f32 %v1520, %v1776
        %1778 = vmatprep.mubr.f32.mxu0 %v542
        %1779 = vmatmul.mubr.f32.gmra.mrb[0].mxu0 %v541
        %v1780 = vpop.f32.mrb[0].mxu0
        %v1781 = vadd.f32 %v1524, %v1780
        %v1782 = vpop.f32.mrb[0].mxu0
        %v1783 = vadd.f32 %v1526, %v1782
        %1784 = vmatprep.mubr.f32.mxu0 %v546
        %1785 = vmatmul.mubr.f32.gmra.mrb[0].mxu0 %v545
        %v1786 = vpop.f32.mrb[0].mxu0
        %v1787 = vadd.f32 %v1530, %v1786
        %v1788 = vpop.f32.mrb[0].mxu0
        %v1789 = vadd.f32 %v1532, %v1788
        %1790 = vmatprep.mubr.f32.mxu0 %v550
        %1791 = vmatmul.mubr.f32.gmra.mrb[0].mxu0 %v549
        %v1792 = vpop.f32.mrb[0].mxu0
        %v1793 = vadd.f32 %v1536, %v1792
        %v1794 = vpop.f32.mrb[0].mxu0
        %v1795 = vadd.f32 %v1538, %v1794
        %1796 = vmatprep.mubr.f32.mxu0 %v554
        %1797 = vmatmul.mubr.f32.gmra.mrb[0].mxu0 %v553
        %v1798 = vpop.f32.mrb[0].mxu0
        %v1799 = vadd.f32 %v1542, %v1798
        %v1800 = vpop.f32.mrb[0].mxu0
        %v1801 = vadd.f32 %v1544, %v1800
        %1802 = vmatprep.mubr.f32.mxu0 %v558
        %1803 = vmatmul.mubr.f32.gmra.mrb[0].mxu0 %v557
        %v1804 = vpop.f32.mrb[0].mxu0
        %v1805 = vadd.f32 %v1548, %v1804
        %v1806 = vpop.f32.mrb[0].mxu0
        %v1807 = vadd.f32 %v1550, %v1806
        %1808 = vmatprep.mubr.f32.mxu0 %v562
        %1809 = vmatmul.mubr.f32.gmra.mrb[0].mxu0 %v561
        %v1810 = vpop.f32.mrb[0].mxu0
        %v1811 = vadd.f32 %v1554, %v1810
        %v1812 = vpop.f32.mrb[0].mxu0
        %v1813 = vadd.f32 %v1556, %v1812
        %1814 = vmatprep.mubr.f32.mxu0 %v566
        %1815 = vmatmul.mubr.f32.gmra.mrb[0].mxu0 %v565
        %v1816 = vpop.f32.mrb[0].mxu0
        %v1817 = vadd.f32 %v1560, %v1816
        %v1818 = vpop.f32.mrb[0].mxu0
        %v1819 = vadd.f32 %v1562, %v1818
        %1820 = vmatprep.mubr.f32.mxu0 %v570
        %1821 = vmatmul.mubr.f32.gmra.mrb[0].mxu0 %v569
        %v1822 = vpop.f32.mrb[0].mxu0
        %v1823 = vadd.f32 %v1566, %v1822
        %v1824 = vpop.f32.mrb[0].mxu0
        %v1825 = vadd.f32 %v1568, %v1824
        %1826 = vmatprep.mubr.f32.mxu0 %v574
        %1827 = vmatmul.mubr.f32.gmra.mrb[0].mxu0 %v573
        %v1828 = vpop.f32.mrb[0].mxu0
        %v1829 = vadd.f32 %v1572, %v1828
        %v1830 = vpop.f32.mrb[0].mxu0
        %v1831 = vadd.f32 %v1574, %v1830
        %1832 = vmatprep.mubr.f32.mxu0 %v578
        %1833 = vmatmul.mubr.f32.gmra.mrb[0].mxu0 %v577
        %v1834 = vpop.f32.mrb[0].mxu0
        %v1835 = vadd.f32 %v1578, %v1834
        %v1836 = vpop.f32.mrb[0].mxu0
        %v1837 = vadd.f32 %v1580, %v1836
        %1838 = vmatprep.mubr.f32.mxu0 %v582
        %1839 = vmatmul.mubr.f32.gmra.mrb[0].mxu0 %v581
        %v1840 = vpop.f32.mrb[0].mxu0
        %v1841 = vadd.f32 %v1584, %v1840
        %v1842 = vpop.f32.mrb[0].mxu0
        %v1843 = vadd.f32 %v1586, %v1842
        %1844 = vmatprep.mubr.f32.mxu0 %v586
        %1845 = vmatmul.mubr.f32.gmra.mrb[0].mxu0 %v585
        %v1846 = vpop.f32.mrb[0].mxu0
        %v1847 = vadd.f32 %v1590, %v1846
        %v1848 = vpop.f32.mrb[0].mxu0
        %v1849 = vadd.f32 %v1592, %v1848
        %1850 = vmatprep.mubr.f32.mxu0 %v590
        %1851 = vmatmul.mubr.f32.gmra.mrb[0].mxu0 %v589
        %v1852 = vpop.f32.mrb[0].mxu0
        %v1853 = vadd.f32 %v1596, %v1852
        %v1854 = vpop.f32.mrb[0].mxu0
        %v1855 = vadd.f32 %v1598, %v1854
        %1856 = vmatprep.mubr.f32.mxu0 %v594
        %1857 = vmatmul.mubr.f32.gmra.mrb[0].mxu0 %v593
        %v1858 = vpop.f32.mrb[0].mxu0
        %v1859 = vadd.f32 %v1602, %v1858
        %v1860 = vpop.f32.mrb[0].mxu0
        %v1861 = vadd.f32 %v1604, %v1860
        %1862 = vmatprep.mubr.f32.mxu0 %v598
        %1863 = vmatmul.mubr.f32.gmra.mrb[0].mxu0 %v597
        %v1864 = vpop.f32.mrb[0].mxu0
        %v1865 = vadd.f32 %v1608, %v1864
        %v1866 = vpop.f32.mrb[0].mxu0
        %v1867 = vadd.f32 %v1610, %v1866
        %1868 = vmatprep.mubr.f32.mxu0 %v602
        %1869 = vmatmul.mubr.f32.gmra.mrb[0].mxu0 %v601
        %v1870 = vpop.f32.mrb[0].mxu0
        %v1871 = vadd.f32 %v1614, %v1870
        %v1872 = vpop.f32.mrb[0].mxu0
        %v1873 = vadd.f32 %v1616, %v1872
        %1874 = vmatprep.mubr.f32.mxu0 %v606
        %1875 = vmatmul.mubr.f32.gmra.mrb[0].mxu0 %v605
        %v1876 = vpop.f32.mrb[0].mxu0
        %v1877 = vadd.f32 %v1620, %v1876
        %v1878 = vpop.f32.mrb[0].mxu0
        %v1879 = vadd.f32 %v1622, %v1878
        %1880 = vmatprep.mubr.f32.mxu0 %v610
        %1881 = vmatmul.mubr.f32.gmra.mrb[0].mxu0 %v609
        %v1882 = vpop.f32.mrb[0].mxu0
        %v1883 = vadd.f32 %v1626, %v1882
        %v1884 = vpop.f32.mrb[0].mxu0
        %v1885 = vadd.f32 %v1628, %v1884
        %1886 = vmatprep.mubr.f32.mxu0 %v614
        %1887 = vmatmul.mubr.f32.gmra.mrb[0].mxu0 %v613
        %v1888 = vpop.f32.mrb[0].mxu0
        %v1889 = vadd.f32 %v1632, %v1888
        %v1890 = vpop.f32.mrb[0].mxu0
        %v1891 = vadd.f32 %v1634, %v1890
        %1892 = vmatprep.mubr.f32.mxu0 %v618
        %1893 = vmatmul.mubr.f32.gmra.mrb[0].mxu0 %v617
        %v1894 = vpop.f32.mrb[0].mxu0
        %v1895 = vadd.f32 %v1638, %v1894
        %v1896 = vpop.f32.mrb[0].mxu0
        %v1897 = vadd.f32 %v1640, %v1896
        %1898 = vmatprep.mubr.f32.mxu0 %v622
        %1899 = vmatmul.mubr.f32.gmra.mrb[0].mxu0 %v621
        %v1900 = vpop.f32.mrb[0].mxu0
        %v1901 = vadd.f32 %v1644, %v1900
        %v1902 = vpop.f32.mrb[0].mxu0
        %v1903 = vadd.f32 %v1646, %v1902
        %1904 = vmatprep.mubr.f32.mxu0 %v626
        %1905 = vmatmul.mubr.f32.gmra.mrb[0].mxu0 %v625
        %v1906 = vpop.f32.mrb[0].mxu0
        %v1907 = vadd.f32 %v1650, %v1906
        %v1908 = vpop.f32.mrb[0].mxu0
        %v1909 = vadd.f32 %v1652, %v1908
        %1910 = vdwg.mxu0
        %v1911 = vadd.f32 %v371, %v1207
        %v1912 = vadd.f32 %v372, %v1209
        %v1913 = vadd.f32 %v373, %v1721
        %v1914 = vadd.f32 %v374, %v1723
        %v1915 = vadd.f32 %v375, %v1213
        %v1916 = vadd.f32 %v376, %v1215
        %v1917 = vadd.f32 %v377, %v1727
        %v1918 = vadd.f32 %v378, %v1729
        %v1919 = vadd.f32 %v379, %v1219
        %v1920 = vadd.f32 %v380, %v1221
        %v1921 = vadd.f32 %v381, %v1733
        %v1922 = vadd.f32 %v382, %v1735
        %v1923 = vadd.f32 %v383, %v1225
        %v1924 = vadd.f32 %v384, %v1227
        %v1925 = vadd.f32 %v385, %v1739
        %v1926 = vadd.f32 %v386, %v1741
        %v1927 = vadd.f32 %v387, %v1231
        %v1928 = vadd.f32 %v388, %v1233
        %v1929 = vadd.f32 %v389, %v1745
        %v1930 = vadd.f32 %v390, %v1747
        %v1931 = vadd.f32 %v391, %v1237
        %v1932 = vadd.f32 %v392, %v1239
        %v1933 = vadd.f32 %v393, %v1751
        %v1934 = vadd.f32 %v394, %v1753
        %v1935 = vadd.f32 %v395, %v1243
        %v1936 = vadd.f32 %v396, %v1245
        %v1937 = vadd.f32 %v397, %v1757
        %v1938 = vadd.f32 %v398, %v1759
        %v1939 = vadd.f32 %v399, %v1249
        %v1940 = vadd.f32 %v400, %v1251
        %v1941 = vadd.f32 %v401, %v1763
        %v1942 = vadd.f32 %v402, %v1765
        %v1943 = vadd.f32 %v403, %v1255
        %v1944 = vadd.f32 %v404, %v1257
        %v1945 = vadd.f32 %v405, %v1769
        %v1946 = vadd.f32 %v406, %v1771
        %v1947 = vadd.f32 %v407, %v1261
        %v1948 = vadd.f32 %v408, %v1263
        %v1949 = vadd.f32 %v409, %v1775
        %v1950 = vadd.f32 %v410, %v1777
        %v1951 = vadd.f32 %v411, %v1267
        %v1952 = vadd.f32 %v412, %v1269
        %v1953 = vadd.f32 %v413, %v1781
        %v1954 = vadd.f32 %v414, %v1783
        %v1955 = vadd.f32 %v415, %v1273
        %v1956 = vadd.f32 %v416, %v1275
        %v1957 = vadd.f32 %v417, %v1787
        %v1958 = vadd.f32 %v418, %v1789
        %v1959 = vadd.f32 %v419, %v1279
        %v1960 = vadd.f32 %v420, %v1281
        %v1961 = vadd.f32 %v421, %v1793
        %v1962 = vadd.f32 %v422, %v1795
        %v1963 = vadd.f32 %v423, %v1285
        %v1964 = vadd.f32 %v424, %v1287
        %v1965 = vadd.f32 %v425, %v1799
        %v1966 = vadd.f32 %v426, %v1801
        %v1967 = vadd.f32 %v427, %v1291
        %v1968 = vadd.f32 %v428, %v1293
        %v1969 = vadd.f32 %v429, %v1805
        %v1970 = vadd.f32 %v430, %v1807
        %v1971 = vadd.f32 %v431, %v1297
        %v1972 = vadd.f32 %v432, %v1299
        %v1973 = vadd.f32 %v433, %v1811
        %v1974 = vadd.f32 %v434, %v1813
        %v1975 = vadd.f32 %v435, %v1303
        %v1976 = vadd.f32 %v436, %v1305
        %v1977 = vadd.f32 %v437, %v1817
        %v1978 = vadd.f32 %v438, %v1819
        %v1979 = vadd.f32 %v439, %v1309
        %v1980 = vadd.f32 %v440, %v1311
        %v1981 = vadd.f32 %v441, %v1823
        %v1982 = vadd.f32 %v442, %v1825
        %v1983 = vadd.f32 %v443, %v1315
        %v1984 = vadd.f32 %v444, %v1317
        %v1985 = vadd.f32 %v445, %v1829
        %v1986 = vadd.f32 %v446, %v1831
        %v1987 = vadd.f32 %v447, %v1321
        %v1988 = vadd.f32 %v448, %v1323
        %v1989 = vadd.f32 %v449, %v1835
        %v1990 = vadd.f32 %v450, %v1837
        %v1991 = vadd.f32 %v451, %v1327
        %v1992 = vadd.f32 %v452, %v1329
        %v1993 = vadd.f32 %v453, %v1841
        %v1994 = vadd.f32 %v454, %v1843
        %v1995 = vadd.f32 %v455, %v1333
        %v1996 = vadd.f32 %v456, %v1335
        %v1997 = vadd.f32 %v457, %v1847
        %v1998 = vadd.f32 %v458, %v1849
        %v1999 = vadd.f32 %v459, %v1339
        %v2000 = vadd.f32 %v460, %v1341
        %v2001 = vadd.f32 %v461, %v1853
        %v2002 = vadd.f32 %v462, %v1855
        %v2003 = vadd.f32 %v463, %v1345
        %v2004 = vadd.f32 %v464, %v1347
        %v2005 = vadd.f32 %v465, %v1859
        %v2006 = vadd.f32 %v466, %v1861
        %v2007 = vadd.f32 %v467, %v1351
        %v2008 = vadd.f32 %v468, %v1353
        %v2009 = vadd.f32 %v469, %v1865
        %v2010 = vadd.f32 %v470, %v1867
        %v2011 = vadd.f32 %v471, %v1357
        %v2012 = vadd.f32 %v472, %v1359
        %v2013 = vadd.f32 %v473, %v1871
        %v2014 = vadd.f32 %v474, %v1873
        %v2015 = vadd.f32 %v475, %v1363
        %v2016 = vadd.f32 %v476, %v1365
        %v2017 = vadd.f32 %v477, %v1877
        %v2018 = vadd.f32 %v478, %v1879
        %v2019 = vadd.f32 %v479, %v1369
        %v2020 = vadd.f32 %v480, %v1371
        %v2021 = vadd.f32 %v481, %v1883
        %v2022 = vadd.f32 %v482, %v1885
        %v2023 = vadd.f32 %v483, %v1375
        %v2024 = vadd.f32 %v484, %v1377
        %v2025 = vadd.f32 %v485, %v1889
        %v2026 = vadd.f32 %v486, %v1891
        %v2027 = vadd.f32 %v487, %v1381
        %v2028 = vadd.f32 %v488, %v1383
        %v2029 = vadd.f32 %v489, %v1895
        %v2030 = vadd.f32 %v490, %v1897
        %v2031 = vadd.f32 %v491, %v1387
        %v2032 = vadd.f32 %v492, %v1389
        %v2033 = vadd.f32 %v493, %v1901
        %v2034 = vadd.f32 %v494, %v1903
        %v2035 = vadd.f32 %v495, %v1393
        %v2036 = vadd.f32 %v496, %v1395
        %v2037 = vadd.f32 %v497, %v1907
        %v2038 = vadd.f32 %v498, %v1909
        %2039 = vst [vmem:[%s232] sm:$0xff] %v1911
        %2040 = vst [vmem:[%s232 + $0x8] sm:$0xff] %v1912
        %2041 = vst [vmem:[%s232 + $0x10] sm:$0xff] %v1913
        %2042 = vst [vmem:[%s232 + $0x18] sm:$0xff] %v1914
        %2043 = vst [vmem:[%s232 + $0x20] sm:$0xff] %v1915
        %2044 = vst [vmem:[%s232 + $0x28] sm:$0xff] %v1916
        %2045 = vst [vmem:[%s232 + $0x30] sm:$0xff] %v1917
        %2046 = vst [vmem:[%s232 + $0x38] sm:$0xff] %v1918
        %2047 = vst [vmem:[%s232 + $0x40] sm:$0xff] %v1919
        %2048 = vst [vmem:[%s232 + $0x48] sm:$0xff] %v1920
        %2049 = vst [vmem:[%s232 + $0x50] sm:$0xff] %v1921
        %2050 = vst [vmem:[%s232 + $0x58] sm:$0xff] %v1922
        %2051 = vst [vmem:[%s232 + $0x60] sm:$0xff] %v1923
        %2052 = vst [vmem:[%s232 + $0x68] sm:$0xff] %v1924
        %2053 = vst [vmem:[%s232 + $0x70] sm:$0xff] %v1925
        %2054 = vst [vmem:[%s232 + $0x78] sm:$0xff] %v1926
        %2055 = vst [vmem:[%s232 + $0x80] sm:$0xff] %v1927
        %2056 = vst [vmem:[%s232 + $0x88] sm:$0xff] %v1928
        %2057 = vst [vmem:[%s232 + $0x90] sm:$0xff] %v1929
        %2058 = vst [vmem:[%s232 + $0x98] sm:$0xff] %v1930
        %2059 = vst [vmem:[%s232 + $0xa0] sm:$0xff] %v1931
        %2060 = vst [vmem:[%s232 + $0xa8] sm:$0xff] %v1932
        %2061 = vst [vmem:[%s232 + $0xb0] sm:$0xff] %v1933
        %2062 = vst [vmem:[%s232 + $0xb8] sm:$0xff] %v1934
        %2063 = vst [vmem:[%s232 + $0xc0] sm:$0xff] %v1935
        %2064 = vst [vmem:[%s232 + $0xc8] sm:$0xff] %v1936
        %2065 = vst [vmem:[%s232 + $0xd0] sm:$0xff] %v1937
        %2066 = vst [vmem:[%s232 + $0xd8] sm:$0xff] %v1938
        %2067 = vst [vmem:[%s232 + $0xe0] sm:$0xff] %v1939
        %2068 = vst [vmem:[%s232 + $0xe8] sm:$0xff] %v1940
        %2069 = vst [vmem:[%s232 + $0xf0] sm:$0xff] %v1941
        %2070 = vst [vmem:[%s232 + $0xf8] sm:$0xff] %v1942
        %2071 = vst [vmem:[%s232 + $0x100] sm:$0xff] %v1943
        %2072 = vst [vmem:[%s232 + $0x108] sm:$0xff] %v1944
        %2073 = vst [vmem:[%s232 + $0x110] sm:$0xff] %v1945
        %2074 = vst [vmem:[%s232 + $0x118] sm:$0xff] %v1946
        %2075 = vst [vmem:[%s232 + $0x120] sm:$0xff] %v1947
        %2076 = vst [vmem:[%s232 + $0x128] sm:$0xff] %v1948
        %2077 = vst [vmem:[%s232 + $0x130] sm:$0xff] %v1949
        %2078 = vst [vmem:[%s232 + $0x138] sm:$0xff] %v1950
        %2079 = vst [vmem:[%s232 + $0x140] sm:$0xff] %v1951
        %2080 = vst [vmem:[%s232 + $0x148] sm:$0xff] %v1952
        %2081 = vst [vmem:[%s232 + $0x150] sm:$0xff] %v1953
        %2082 = vst [vmem:[%s232 + $0x158] sm:$0xff] %v1954
        %2083 = vst [vmem:[%s232 + $0x160] sm:$0xff] %v1955
        %2084 = vst [vmem:[%s232 + $0x168] sm:$0xff] %v1956
        %2085 = vst [vmem:[%s232 + $0x170] sm:$0xff] %v1957
        %2086 = vst [vmem:[%s232 + $0x178] sm:$0xff] %v1958
        %2087 = vst [vmem:[%s232 + $0x180] sm:$0xff] %v1959
        %2088 = vst [vmem:[%s232 + $0x188] sm:$0xff] %v1960
        %2089 = vst [vmem:[%s232 + $0x190] sm:$0xff] %v1961
        %2090 = vst [vmem:[%s232 + $0x198] sm:$0xff] %v1962
        %2091 = vst [vmem:[%s232 + $0x1a0] sm:$0xff] %v1963
        %2092 = vst [vmem:[%s232 + $0x1a8] sm:$0xff] %v1964
        %2093 = vst [vmem:[%s232 + $0x1b0] sm:$0xff] %v1965
        %2094 = vst [vmem:[%s232 + $0x1b8] sm:$0xff] %v1966
        %2095 = vst [vmem:[%s232 + $0x1c0] sm:$0xff] %v1967
        %2096 = vst [vmem:[%s232 + $0x1c8] sm:$0xff] %v1968
        %2097 = vst [vmem:[%s232 + $0x1d0] sm:$0xff] %v1969
        %2098 = vst [vmem:[%s232 + $0x1d8] sm:$0xff] %v1970
        %2099 = vst [vmem:[%s232 + $0x1e0] sm:$0xff] %v1971
        %2100 = vst [vmem:[%s232 + $0x1e8] sm:$0xff] %v1972
        %2101 = vst [vmem:[%s232 + $0x1f0] sm:$0xff] %v1973
        %2102 = vst [vmem:[%s232 + $0x1f8] sm:$0xff] %v1974
        %2103 = vst [vmem:[%s232 + $0x200] sm:$0xff] %v1975
        %2104 = vst [vmem:[%s232 + $0x208] sm:$0xff] %v1976
        %2105 = vst [vmem:[%s232 + $0x210] sm:$0xff] %v1977
        %2106 = vst [vmem:[%s232 + $0x218] sm:$0xff] %v1978
        %2107 = vst [vmem:[%s232 + $0x220] sm:$0xff] %v1979
        %2108 = vst [vmem:[%s232 + $0x228] sm:$0xff] %v1980
        %2109 = vst [vmem:[%s232 + $0x230] sm:$0xff] %v1981
        %2110 = vst [vmem:[%s232 + $0x238] sm:$0xff] %v1982
        %2111 = vst [vmem:[%s232 + $0x240] sm:$0xff] %v1983
        %2112 = vst [vmem:[%s232 + $0x248] sm:$0xff] %v1984
        %2113 = vst [vmem:[%s232 + $0x250] sm:$0xff] %v1985
        %2114 = vst [vmem:[%s232 + $0x258] sm:$0xff] %v1986
        %2115 = vst [vmem:[%s232 + $0x260] sm:$0xff] %v1987
        %2116 = vst [vmem:[%s232 + $0x268] sm:$0xff] %v1988
        %2117 = vst [vmem:[%s232 + $0x270] sm:$0xff] %v1989
        %2118 = vst [vmem:[%s232 + $0x278] sm:$0xff] %v1990
        %2119 = vst [vmem:[%s232 + $0x280] sm:$0xff] %v1991
        %2120 = vst [vmem:[%s232 + $0x288] sm:$0xff] %v1992
        %2121 = vst [vmem:[%s232 + $0x290] sm:$0xff] %v1993
        %2122 = vst [vmem:[%s232 + $0x298] sm:$0xff] %v1994
        %2123 = vst [vmem:[%s232 + $0x2a0] sm:$0xff] %v1995
        %2124 = vst [vmem:[%s232 + $0x2a8] sm:$0xff] %v1996
        %2125 = vst [vmem:[%s232 + $0x2b0] sm:$0xff] %v1997
        %2126 = vst [vmem:[%s232 + $0x2b8] sm:$0xff] %v1998
        %2127 = vst [vmem:[%s232 + $0x2c0] sm:$0xff] %v1999
        %2128 = vst [vmem:[%s232 + $0x2c8] sm:$0xff] %v2000
        %2129 = vst [vmem:[%s232 + $0x2d0] sm:$0xff] %v2001
        %2130 = vst [vmem:[%s232 + $0x2d8] sm:$0xff] %v2002
        %2131 = vst [vmem:[%s232 + $0x2e0] sm:$0xff] %v2003
        %2132 = vst [vmem:[%s232 + $0x2e8] sm:$0xff] %v2004
        %2133 = vst [vmem:[%s232 + $0x2f0] sm:$0xff] %v2005
        %2134 = vst [vmem:[%s232 + $0x2f8] sm:$0xff] %v2006
        %2135 = vst [vmem:[%s232 + $0x300] sm:$0xff] %v2007
        %2136 = vst [vmem:[%s232 + $0x308] sm:$0xff] %v2008
        %2137 = vst [vmem:[%s232 + $0x310] sm:$0xff] %v2009
        %2138 = vst [vmem:[%s232 + $0x318] sm:$0xff] %v2010
        %2139 = vst [vmem:[%s232 + $0x320] sm:$0xff] %v2011
        %2140 = vst [vmem:[%s232 + $0x328] sm:$0xff] %v2012
        %2141 = vst [vmem:[%s232 + $0x330] sm:$0xff] %v2013
        %2142 = vst [vmem:[%s232 + $0x338] sm:$0xff] %v2014
        %2143 = vst [vmem:[%s232 + $0x340] sm:$0xff] %v2015
        %2144 = vst [vmem:[%s232 + $0x348] sm:$0xff] %v2016
        %2145 = vst [vmem:[%s232 + $0x350] sm:$0xff] %v2017
        %2146 = vst [vmem:[%s232 + $0x358] sm:$0xff] %v2018
        %2147 = vst [vmem:[%s232 + $0x360] sm:$0xff] %v2019
        %2148 = vst [vmem:[%s232 + $0x368] sm:$0xff] %v2020
        %2149 = vst [vmem:[%s232 + $0x370] sm:$0xff] %v2021
        %2150 = vst [vmem:[%s232 + $0x378] sm:$0xff] %v2022
        %2151 = vst [vmem:[%s232 + $0x380] sm:$0xff] %v2023
        %2152 = vst [vmem:[%s232 + $0x388] sm:$0xff] %v2024
        %2153 = vst [vmem:[%s232 + $0x390] sm:$0xff] %v2025
        %2154 = vst [vmem:[%s232 + $0x398] sm:$0xff] %v2026
        %2155 = vst [vmem:[%s232 + $0x3a0] sm:$0xff] %v2027
        %2156 = vst [vmem:[%s232 + $0x3a8] sm:$0xff] %v2028
        %2157 = vst [vmem:[%s232 + $0x3b0] sm:$0xff] %v2029
        %2158 = vst [vmem:[%s232 + $0x3b8] sm:$0xff] %v2030
        %2159 = vst [vmem:[%s232 + $0x3c0] sm:$0xff] %v2031
        %2160 = vst [vmem:[%s232 + $0x3c8] sm:$0xff] %v2032
        %2161 = vst [vmem:[%s232 + $0x3d0] sm:$0xff] %v2033
        %2162 = vst [vmem:[%s232 + $0x3d8] sm:$0xff] %v2034
        %2163 = vst [vmem:[%s232 + $0x3e0] sm:$0xff] %v2035
        %2164 = vst [vmem:[%s232 + $0x3e8] sm:$0xff] %v2036
        %2165 = vst [vmem:[%s232 + $0x3f0] sm:$0xff] %v2037
        %2166 = vst [vmem:[%s232 + $0x3f8] sm:$0xff] %v2038
        %s2167 = sand.u32 %s107, 1
        %s2168 = scalar_lea.sflag [#allocation4], %s2167
        %s2169 = sand.u32 %s107, 1
        %s2170 = smul.addr %s2169, 1024
        %s2171 = scalar_lea.vmem [#allocation7], %s2170
        // Predicated region
        $region41: #{tpu_custom_call.1} parent=27 // pred_check
          %p2172 = pneg %p117
        $region42: #{tpu_custom_call.1} parent=27 // pred_check_branch
          %2174 = sbr.rel (%p2172) target = $region44
        $region43: #{tpu_custom_call.1} parent=27 // pred_region
          %s2175 = smul.u32 32, %s27
          %s2176 = smul.u32 4, %s28
          %s2178 = ssub.s32 16384, 16384
          %2179 = vsyncadd %s2168, %s2178
          %s2180 = smul.addr %s2175, 4
          %s2181 = sadd.s32 %s2176, %s2180
          %s2182 = smul.addr %s2181, 128
          %s2183 = scalar_lea.hbm %s2, %s2182
          %s2184 = sshll.u32 %s2171, 4
          %s2185 = int_to_ptr.vmem [resolvable:$true] %s2184
          %2190 = dma.vmem_to_hbm [thread:$0]  %s2185, 16384, %s2183, %s2168, 512, 512, 32
        $region44: #{tpu_custom_call.1} parent=27 // pred_fallthru
          _
      $region28: #{tpu_custom_call.1} parent=5 // pred_fallthru
        _
      %p2191 = scmp.le.s32.totalorder 2, %s17
      // Predicated region
      $region45: #{tpu_custom_call.1} parent=5 // pred_check
        %p2192 = pneg %p2191
      $region46: #{tpu_custom_call.1} parent=5 // pred_check_branch
        %2194 = sbr.rel (%p2192) target = $region48
      $region47: #{tpu_custom_call.1} parent=5 // pred_region
        %s2195 = ssub.s32 %s17, 2
        // Predicated region
        $region49: #{tpu_custom_call.1} parent=47 // pred_check
          %p2196 = pneg %p123
        $region50: #{tpu_custom_call.1} parent=47 // pred_check_branch
          %2198 = sbr.rel (%p2196) target = $region52
        $region51: #{tpu_custom_call.1} parent=47 // pred_region
          %s2199 = sand.u32 %s108, 1
          %s2200 = scalar_lea.sflag [#allocation4], %s2199
          %s2201 = sand.u32 %s108, 1
          %s2202 = smul.addr %s2201, 1024
          %s2203 = scalar_lea.vmem [#allocation7], %s2202
          %2204 = dma.done %s2200, 16384
        $region52: #{tpu_custom_call.1} parent=47 // pred_fallthru
          _
      $region48: #{tpu_custom_call.1} parent=5 // pred_fallthru
        _
    $region6: #{tpu_custom_call.1} parent=1 // loop_footer
      %s21 = sadd.s32 1, %s17
    $region7: #{tpu_custom_call.1} parent=1 // loop_footer_branch
      %16 = sbr.rel target = $region3
    $region8: #{tpu_custom_call.1} parent=1 // loop_exit
      _
    %2205 = vsyncpa [#allocation3], 1
    %s2206 = scalar_lea.sflag [#allocation3], 1
    %2207 = vsyncpa %s2206, 1
    %2208 = vsyncpa [#allocation6], 1
    %s2209 = scalar_lea.sflag [#allocation6], 1
    %2210 = vsyncpa %s2209, 1
    %2211 = vsyncpa [#allocation4], 1
    %s2212 = scalar_lea.sflag [#allocation4], 1
    %2213 = vsyncpa %s2212, 1

</llo_original>
